<compile_context>
chip_gen: v7x
topology: tpu7x:2x2x1
jax: 0.10.0
libtpu: 0.0.40
codegen_flags: <defaults>
</compile_context>

<pallas_src>
import functools

import jax
import jax.numpy as jnp
from jax.experimental import pallas as pl
from jax.experimental.pallas import tpu as pltpu

_BN_EPS = 1e-5
_LANE = 128


def _round_up(x: int, m: int) -> int:
    return (x + m - 1) // m * m


# ---------------------------------------------------------------------------
# Fused kernel: whole MLP for one pixel tile, statically unrolled over layers.
# refs = (x, [w_i, shift_i] * n_hidden, w_out, b_out, o, lhs_scratch)
# ---------------------------------------------------------------------------
def _make_fused_kernel(n_hidden: int, cin: int):
    def kernel(*refs):
        x_ref, o_ref, lhs_scr = refs[0], refs[-2], refs[-1]

        # ---- layer-0-only NaN handling --------------------------------------
        x = x_ref[...]                               # [tile_n, cin] f32, un-padded lanes
        nanmask = jnp.isnan(x)
        pmask = nanmask[:, 0:1]                      # per-pixel NaN mask (channel 0)
        x0 = jnp.where(nanmask, 0.0, x)              # masked_fill(mask, 0)

        # Stage the narrow input into a zero-padded 128-lane slab for the MXU.
        # Zero pad lanes every step: scratch is per-core and a megacore shard
        # may start at program_id != 0, so a one-time init is not safe.
        lhs_scr[...] = jnp.zeros_like(lhs_scr)
        lhs_scr[:, :cin] = x0
        fea = lhs_scr[...].astype(jnp.bfloat16)      # [tile_n, cin_p]

        # ---- hidden layers: matmul + shift + LeakyReLU (NaN passes elided) ---
        for li in range(n_hidden):                   # static unroll (LLO visibility)
            w_ref = refs[1 + 2 * li]                 # [K_p, cout_p] bf16, BN scale folded in
            t_ref = refs[2 + 2 * li]                 # [1, cout_p] f32, BN shift + conv bias
            y = jnp.dot(fea, w_ref[...], preferred_element_type=jnp.float32)  # MXU, f32 acc
            z = y + t_ref[...]                       # eval-mode BN (scale already in W)
            z = jnp.maximum(z, 0.2 * z)              # LeakyReLU(0.2), single VPU op
            fea = z.astype(jnp.bfloat16)

        # ---- output layer: matmul + bias; NaN re-applied once per pixel ------
        w_ref = refs[1 + 2 * n_hidden]
        b_ref = refs[2 + 2 * n_hidden]
        y = jnp.dot(fea, w_ref[...], preferred_element_type=jnp.float32) + b_ref[...]
        cout = o_ref.shape[-1]
        o_ref[...] = jnp.where(pmask, jnp.nan, y[:, :cout]).astype(o_ref.dtype)

    return kernel


# ---------------------------------------------------------------------------
# Core wrapper on the flat pixel slab (preferred entry point — no layout passes).
# ---------------------------------------------------------------------------
def forward_pixels(kernel_params, xp, *, channels, tile_n=2048):
    """xp: [n_pix, cin] pixel-major slab -> [n_pix, cout] (eval mode)."""
    channels = tuple(channels)
    n_hidden = len(channels) - 2
    cin, cout = channels[0], channels[-1]
    n_pix = xp.shape[0]
    assert xp.shape[1] == cin

    # Large tiles amortize per-step overhead; clamp to the problem size.
    # (On v7x keep grid length >= 2 when n_pix allows so both TCs get work.)
    tile_n = max(8, min(_round_up(tile_n, 8), _round_up(n_pix, 8)))
    n_pad = _round_up(n_pix, tile_n)
    if n_pad != n_pix:
        xp = jnp.pad(xp, ((0, n_pad - n_pix), (0, 0)))

    cin_p = _round_up(cin, _LANE)
    grid = (n_pad // tile_n,)

    # Input/output stay channel-un-padded in HBM (last block dim == full array dim
    # is legal) — avoids the 32x read / 8x write inflation of 128-lane padding.
    in_specs = [pl.BlockSpec((tile_n, cin), lambda i: (i, 0))]
    for p in kernel_params:
        # Constant index_map -> weights / BN constants stay VMEM-resident across
        # grid steps.  (pl.Buffered(1) would halve their residency on v7x, but the
        # operands here are tiny so default buffering is kept.)
        in_specs.append(pl.BlockSpec(p.shape, lambda i: (0, 0)))

    weights = kernel_params[0::2]
    flops = 2 * n_pad * sum(int(w.shape[0]) * int(w.shape[1]) for w in weights)
    param_bytes = sum(int(p.size) * p.dtype.itemsize for p in kernel_params)
    bytes_accessed = int(xp.size) * xp.dtype.itemsize + n_pad * cout * 4 + param_bytes

    # Explicit VMEM limit so large tile_n keeps full double-buffering everywhere
    # (v5e scoped default is only 16 MiB; v6e/v7x 32 MiB).
    max_cp = max(int(w.shape[1]) for w in weights)
    est = (2 * 2 * tile_n * (cin + cout) * 4        # double-buffered I/O blocks
           + 2 * param_bytes                        # double-buffered constants
           + tile_n * cin_p * 4                     # lhs staging scratch
           + 6 * tile_n * max_cp * 4)               # live f32/bf16 temporaries
    vmem_limit = int(min(100 * 1024 * 1024, max(32 * 1024 * 1024, 2 * est)))

    out2d = pl.pallas_call(
        _make_fused_kernel(n_hidden, cin),
        out_shape=jax.ShapeDtypeStruct((n_pad, cout), jnp.float32),
        grid=grid,
        in_specs=in_specs,
        out_specs=pl.BlockSpec((tile_n, cout), lambda i: (i, 0)),
        scratch_shapes=[pltpu.VMEM((tile_n, cin_p), jnp.float32)],
        compiler_params=pltpu.CompilerParams(
            dimension_semantics=("parallel",),
            vmem_limit_bytes=vmem_limit),
        cost_estimate=pl.CostEstimate(flops=int(flops), transcendentals=0,
                                      bytes_accessed=int(bytes_accessed)),
    )(xp, *kernel_params)

    return out2d[:n_pix] if n_pad != n_pix else out2d


def fused_forward(kernel_params, x, *, channels, tile_n=2048):
    """NCHW convenience wrapper (pure layout plumbing around forward_pixels).
    Callers that already hold NHWC / flat activations should use forward_pixels
    directly to avoid the two extra HBM transpose passes."""
    bs, c, h, w = x.shape
    assert c == channels[0]
    xp = jnp.transpose(x, (0, 2, 3, 1)).reshape(bs * h * w, c)
    out = forward_pixels(kernel_params, xp, channels=channels, tile_n=tile_n)
    out = out.reshape(bs, h, w, channels[-1])
    return jnp.transpose(out, (0, 3, 1, 2))


# ---------------------------------------------------------------------------
# Parameters (PyTorch layout) + kernel-side preparation (pad / fold / bf16).
# ---------------------------------------------------------------------------
def init_params(key, channels):
    """Conv2d-1x1 weight [cout, cin], bias [cout]; BatchNorm2d running stats."""
    params = []
    n_layers = len(channels)
    for i in range(n_layers - 1):
        cin, cout = channels[i], channels[i + 1]
        key, kw, kb, krm, krv = jax.random.split(key, 5)
        bound = 1.0 / (cin ** 0.5)
        layer = {
            "w": jax.random.uniform(kw, (cout, cin), jnp.float32, -bound, bound),
            "b": jax.random.uniform(kb, (cout,), jnp.float32, -bound, bound),
        }
        if i < n_layers - 2:  # hidden layers carry BatchNorm2d(cout)
            layer["gamma"] = jnp.ones((cout,), jnp.float32)
            layer["beta"] = jnp.zeros((cout,), jnp.float32)
            layer["mean"] = 0.1 * jax.random.normal(krm, (cout,), jnp.float32)
            layer["var"] = 1.0 + 0.1 * jax.random.uniform(krv, (cout,), jnp.float32)
        params.append(layer)
    return params


def prepare_kernel_params(params):
    """Transpose weights to [cin, cout], pad channel dims to 128 lanes, fold the
    eval-mode BN scale into the weight columns (f32 fold, then bf16 cast), and fold
    conv bias + BN shift into a single additive vector per hidden layer."""
    flat = []
    for layer in params[:-1]:
        cout, cin = layer["w"].shape
        cin_p, cout_p = _round_up(cin, _LANE), _round_up(cout, _LANE)
        scale = layer["gamma"] / jnp.sqrt(layer["var"] + _BN_EPS)
        w_scaled = layer["w"].T * scale[None, :]                 # f32 fold before bf16
        w = jnp.zeros((cin_p, cout_p), jnp.float32)
        w = w.at[:cin, :cout].set(w_scaled).astype(jnp.bfloat16)
        shift = layer["beta"] - layer["mean"] * scale + layer["b"] * scale
        t = jnp.zeros((1, cout_p), jnp.float32).at[0, :cout].set(shift)
        flat += [w, t]
    out = params[-1]
    cout, cin = out["w"].shape
    cin_p, cout_p = _round_up(cin, _LANE), _round_up(cout, _LANE)
    w = jnp.zeros((cin_p, cout_p), jnp.float32)
    w = w.at[:cin, :cout].set(out["w"].T).astype(jnp.bfloat16)
    b = jnp.zeros((1, cout_p), jnp.float32).at[0, :cout].set(out["b"])
    flat += [w, b]
    return flat


# ---------------------------------------------------------------------------
# Pure-jnp reference (mirrors the PyTorch forward in eval mode, same bf16 matmuls).
# ---------------------------------------------------------------------------
def reference_forward(params, x):
    def conv1x1(w, b, a):
        y = jnp.einsum("oi,bihw->bohw", w.astype(jnp.bfloat16),
                       a.astype(jnp.bfloat16),
                       preferred_element_type=jnp.float32)
        return y + b[None, :, None, None]

    fea = x
    for layer in params[:-1]:
        mask = jnp.isnan(fea)
        fea0 = jnp.where(mask, 0.0, fea)
        y = conv1x1(layer["w"], layer["b"], fea0)
        y = jnp.where(mask[:, 0:1, :, :], jnp.nan, y)
        # process_nan_2d
        mask2 = jnp.isnan(y)
        nan_mean = jnp.nanmean(y, axis=(0, 2, 3), keepdims=True)
        y = jnp.where(mask2, nan_mean, y)
        # BatchNorm2d (eval) + LeakyReLU(0.2); Dropout2d identity in eval
        scale = layer["gamma"] / jnp.sqrt(layer["var"] + _BN_EPS)
        shift = layer["beta"] - layer["mean"] * scale
        z = y * scale[None, :, None, None] + shift[None, :, None, None]
        z = jnp.where(z > 0, z, 0.2 * z)
        fea = jnp.where(mask2, jnp.nan, z)
    out = params[-1]
    mask = jnp.isnan(fea)
    fea0 = jnp.where(mask, 0.0, fea)
    y = conv1x1(out["w"], out["b"], fea0)
    return jnp.where(mask[:, 0:1, :, :], jnp.nan, y)


# ---------------------------------------------------------------------------
if __name__ == "__main__":
    channels = [4, 64, 48, 16]     # [in, hid1, hid2, out]
    bs, H, W = 2, 16, 16

    key = jax.random.PRNGKey(0)
    key, kx = jax.random.split(key)
    x = jax.random.normal(kx, (bs, channels[0], H, W), jnp.float32)
    # Exercise the NaN-masking path:
    x = x.at[0, :, 3, 5].set(jnp.nan)     # whole pixel NaN
    x = x.at[1, 0, 7, 2].set(jnp.nan)     # channel-0 NaN -> pixel is re-NaN'd downstream
    x = x.at[1, 2, 9, 11].set(jnp.nan)    # non-0-channel NaN -> zero-filled, not re-NaN'd

    params = init_params(key, channels)
    kparams = prepare_kernel_params(params)

    run = jax.jit(functools.partial(fused_forward, channels=tuple(channels)))
    out = jax.block_until_ready(run(kparams, x))

    ref = reference_forward(params, x)

    assert out.shape == (bs, channels[-1], H, W)
    out_nan = jnp.isnan(out)
    ref_nan = jnp.isnan(ref)
    assert bool(jnp.array_equal(out_nan, ref_nan)), "NaN pattern mismatch vs reference"
    ok = jnp.allclose(jnp.where(out_nan, 0.0, out),
                      jnp.where(ref_nan, 0.0, ref), atol=2e-2, rtol=2e-2)
    assert bool(ok), "value mismatch vs reference"

    print("KERNEL_OK")
</pallas_src>

<mosaic_0001>
module attributes {stable_mosaic.version = 11 : i64} {
  func.func @kernel(%arg0: i32, %arg1: memref<512x4xf32, #tpu.memory_space<vmem>>, %arg2: memref<128x128xbf16, #tpu.memory_space<vmem>>, %arg3: memref<1x128xf32, #tpu.memory_space<vmem>>, %arg4: memref<128x128xbf16, #tpu.memory_space<vmem>>, %arg5: memref<1x128xf32, #tpu.memory_space<vmem>>, %arg6: memref<128x128xbf16, #tpu.memory_space<vmem>>, %arg7: memref<1x128xf32, #tpu.memory_space<vmem>>, %arg8: memref<512x16xf32, #tpu.memory_space<vmem>>, %arg9: memref<512x128xf32, #tpu.memory_space<vmem>>) attributes {dimension_semantics = [#tpu.dimension_semantics<parallel>], iteration_bounds = array<i64: 1>, scalar_prefetch = 0 : i64, scratch_operands = 1 : i64, tpu.core_type = #tpu.core_type<tc>, window_params = [{transform_indices = @transform_0, window_bounds = array<i64: 512, 4>}, {pipeline_mode = #tpu.pipeline_mode<synchronous>, transform_indices = @transform_1, window_bounds = array<i64: 128, 128>}, {pipeline_mode = #tpu.pipeline_mode<synchronous>, transform_indices = @transform_2, window_bounds = array<i64: 1, 128>}, {pipeline_mode = #tpu.pipeline_mode<synchronous>, transform_indices = @transform_3, window_bounds = array<i64: 128, 128>}, {pipeline_mode = #tpu.pipeline_mode<synchronous>, transform_indices = @transform_4, window_bounds = array<i64: 1, 128>}, {pipeline_mode = #tpu.pipeline_mode<synchronous>, transform_indices = @transform_5, window_bounds = array<i64: 128, 128>}, {pipeline_mode = #tpu.pipeline_mode<synchronous>, transform_indices = @transform_6, window_bounds = array<i64: 1, 128>}, {transform_indices = @transform_7, window_bounds = array<i64: 512, 16>}]} {
    %c0 = arith.constant 0 : index
    %c0_0 = arith.constant 0 : index
    %0 = vector.load %arg1[%c0, %c0_0] : memref<512x4xf32, #tpu.memory_space<vmem>>, vector<512x4xf32>
    %1 = arith.cmpf one, %0, %0 : vector<512x4xf32>
    %2 = vector.extract_strided_slice %1 {offsets = [0, 0], sizes = [512, 1], strides = [1, 1]} : vector<512x4xi1> to vector<512x1xi1>
    %cst = arith.constant 0.000000e+00 : f32
    %3 = vector.broadcast %cst : f32 to vector<512x4xf32>
    %4 = arith.select %1, %3, %0 : vector<512x4xi1>, vector<512x4xf32>
    %cst_1 = arith.constant 0.000000e+00 : f32
    %5 = vector.broadcast %cst_1 : f32 to vector<512x128xf32>
    %c0_2 = arith.constant 0 : index
    %c0_3 = arith.constant 0 : index
    %6 = vector.load %arg9[%c0_2, %c0_3] : memref<512x128xf32, #tpu.memory_space<vmem>>, vector<512x128xf32>
    tpu.vector_store %arg9[%c0_2, %c0_3], %5 {strides = array<i32>} : memref<512x128xf32, #tpu.memory_space<vmem>>, vector<512x128xf32>,
    %c0_4 = arith.constant 0 : index
    %c0_5 = arith.constant 0 : index
    %7 = vector.load %arg9[%c0_4, %c0_5] : memref<512x128xf32, #tpu.memory_space<vmem>>, vector<512x4xf32>
    tpu.vector_store %arg9[%c0_4, %c0_5], %4 {strides = array<i32>} : memref<512x128xf32, #tpu.memory_space<vmem>>, vector<512x4xf32>,
    %c0_6 = arith.constant 0 : index
    %c0_7 = arith.constant 0 : index
    %8 = vector.load %arg9[%c0_6, %c0_7] : memref<512x128xf32, #tpu.memory_space<vmem>>, vector<512x128xf32>
    %9 = arith.truncf %8 : vector<512x128xf32> to vector<512x128xbf16>
    %c0_8 = arith.constant 0 : index
    %c0_9 = arith.constant 0 : index
    %10 = vector.load %arg2[%c0_8, %c0_9] : memref<128x128xbf16, #tpu.memory_space<vmem>>, vector<128x128xbf16>
    %cst_10 = arith.constant dense<0.000000e+00> : vector<512x128xf32>
    %11 = tpu.matmul %9, %10, %cst_10 {dimension_numbers = #tpu.dot_dimension_numbers<[1], [0], [0], [1], [0, 0, 1, 1], [], []>} : vector<512x128xbf16>, vector<128x128xbf16>, vector<512x128xf32> -> vector<512x128xf32>
    %c0_11 = arith.constant 0 : index
    %c0_12 = arith.constant 0 : index
    %12 = vector.load %arg3[%c0_11, %c0_12] : memref<1x128xf32, #tpu.memory_space<vmem>>, vector<1x128xf32>
    %13 = vector.broadcast %12 : vector<1x128xf32> to vector<512x128xf32>
    %14 = arith.addf %11, %13 : vector<512x128xf32>
    %cst_13 = arith.constant 2.000000e-01 : f32
    %15 = vector.broadcast %cst_13 : f32 to vector<512x128xf32>
    %16 = arith.mulf %15, %14 : vector<512x128xf32>
    %17 = arith.maximumf %14, %16 : vector<512x128xf32>
    %18 = arith.truncf %17 : vector<512x128xf32> to vector<512x128xbf16>
    %c0_14 = arith.constant 0 : index
    %c0_15 = arith.constant 0 : index
    %19 = vector.load %arg4[%c0_14, %c0_15] : memref<128x128xbf16, #tpu.memory_space<vmem>>, vector<128x128xbf16>
    %cst_16 = arith.constant dense<0.000000e+00> : vector<512x128xf32>
    %20 = tpu.matmul %18, %19, %cst_16 {dimension_numbers = #tpu.dot_dimension_numbers<[1], [0], [0], [1], [0, 0, 1, 1], [], []>} : vector<512x128xbf16>, vector<128x128xbf16>, vector<512x128xf32> -> vector<512x128xf32>
    %c0_17 = arith.constant 0 : index
    %c0_18 = arith.constant 0 : index
    %21 = vector.load %arg5[%c0_17, %c0_18] : memref<1x128xf32, #tpu.memory_space<vmem>>, vector<1x128xf32>
    %22 = vector.broadcast %21 : vector<1x128xf32> to vector<512x128xf32>
    %23 = arith.addf %20, %22 : vector<512x128xf32>
    %cst_19 = arith.constant 2.000000e-01 : f32
    %24 = vector.broadcast %cst_19 : f32 to vector<512x128xf32>
    %25 = arith.mulf %24, %23 : vector<512x128xf32>
    %26 = arith.maximumf %23, %25 : vector<512x128xf32>
    %27 = arith.truncf %26 : vector<512x128xf32> to vector<512x128xbf16>
    %c0_20 = arith.constant 0 : index
    %c0_21 = arith.constant 0 : index
    %28 = vector.load %arg6[%c0_20, %c0_21] : memref<128x128xbf16, #tpu.memory_space<vmem>>, vector<128x128xbf16>
    %cst_22 = arith.constant dense<0.000000e+00> : vector<512x128xf32>
    %29 = tpu.matmul %27, %28, %cst_22 {dimension_numbers = #tpu.dot_dimension_numbers<[1], [0], [0], [1], [0, 0, 1, 1], [], []>} : vector<512x128xbf16>, vector<128x128xbf16>, vector<512x128xf32> -> vector<512x128xf32>
    %c0_23 = arith.constant 0 : index
    %c0_24 = arith.constant 0 : index
    %30 = vector.load %arg7[%c0_23, %c0_24] : memref<1x128xf32, #tpu.memory_space<vmem>>, vector<1x128xf32>
    %31 = vector.broadcast %30 : vector<1x128xf32> to vector<512x128xf32>
    %32 = arith.addf %29, %31 : vector<512x128xf32>
    %33 = vector.extract_strided_slice %32 {offsets = [0, 0], sizes = [512, 16], strides = [1, 1]} : vector<512x128xf32> to vector<512x16xf32>
    %cst_25 = arith.constant 0x7FC00000 : f32
    %34 = vector.shape_cast %2 : vector<512x1xi1> to vector<512x1xi1>
    %35 = vector.broadcast %34 : vector<512x1xi1> to vector<512x16xi1>
    %36 = vector.broadcast %cst_25 : f32 to vector<512x16xf32>
    %37 = arith.select %35, %36, %33 : vector<512x16xi1>, vector<512x16xf32>
    %c0_26 = arith.constant 0 : index
    %c0_27 = arith.constant 0 : index
    %38 = vector.load %arg8[%c0_26, %c0_27] : memref<512x16xf32, #tpu.memory_space<vmem>>, vector<512x16xf32>
    tpu.vector_store %arg8[%c0_26, %c0_27], %37 {strides = array<i32>} : memref<512x16xf32, #tpu.memory_space<vmem>>, vector<512x16xf32>,
    return
  }
  func.func @transform_0(%arg0: i32) -> (i32, i32) {
    %c0_i32 = arith.constant 0 : i32
    %c0_i32_0 = arith.constant 0 : i32
    return %arg0, %c0_i32 : i32, i32
  }
  func.func @transform_1(%arg0: i32) -> (i32, i32) {
    %c0_i32 = arith.constant 0 : i32
    %c0_i32_0 = arith.constant 0 : i32
    %c0_i32_1 = arith.constant 0 : i32
    return %c0_i32, %c0_i32_0 : i32, i32
  }
  func.func @transform_2(%arg0: i32) -> (i32, i32) {
    %c0_i32 = arith.constant 0 : i32
    %c0_i32_0 = arith.constant 0 : i32
    %c0_i32_1 = arith.constant 0 : i32
    return %c0_i32, %c0_i32_0 : i32, i32
  }
  func.func @transform_3(%arg0: i32) -> (i32, i32) {
    %c0_i32 = arith.constant 0 : i32
    %c0_i32_0 = arith.constant 0 : i32
    %c0_i32_1 = arith.constant 0 : i32
    return %c0_i32, %c0_i32_0 : i32, i32
  }
  func.func @transform_4(%arg0: i32) -> (i32, i32) {
    %c0_i32 = arith.constant 0 : i32
    %c0_i32_0 = arith.constant 0 : i32
    %c0_i32_1 = arith.constant 0 : i32
    return %c0_i32, %c0_i32_0 : i32, i32
  }
  func.func @transform_5(%arg0: i32) -> (i32, i32) {
    %c0_i32 = arith.constant 0 : i32
    %c0_i32_0 = arith.constant 0 : i32
    %c0_i32_1 = arith.constant 0 : i32
    return %c0_i32, %c0_i32_0 : i32, i32
  }
  func.func @transform_6(%arg0: i32) -> (i32, i32) {
    %c0_i32 = arith.constant 0 : i32
    %c0_i32_0 = arith.constant 0 : i32
    %c0_i32_1 = arith.constant 0 : i32
    return %c0_i32, %c0_i32_0 : i32, i32
  }
  func.func @transform_7(%arg0: i32) -> (i32, i32) {
    %c0_i32 = arith.constant 0 : i32
    %c0_i32_0 = arith.constant 0 : i32
    return %arg0, %c0_i32 : i32, i32
  }
}

</mosaic_0001>

<llo_original>
// kernel: fused_forward.1
$region0: #{fused_forward.1}
  #allocation0 [shape = 'u32[]', space=smem, size = 0x4, offset = 0x4, fixed_abs, tag = 'smem constant byte address 0x4 - core index']
  #allocation1 [shape = 'u32[144,128]{1,0:T(1,128)}', space=vmem, size = 0x12000, scoped, tag = 'internal scratch']
  #allocation2 [shape = 'f32[512,128]{1,0:T(8,128)}', space=vmem, size = 0x40000, scoped, tag = 'scratch operand']
  %s0 = inlined_call_operand.vmem [shape: f32[512,4], index: 0, kind: input, shape index: {}]
  %s1 = inlined_call_operand.vmem [shape: bf16[128,128], index: 1, kind: input, shape index: {}]
  %s2 = inlined_call_operand.vmem [shape: f32[1,128], index: 2, kind: input, shape index: {}]
  %s3 = inlined_call_operand.vmem [shape: bf16[128,128], index: 3, kind: input, shape index: {}]
  %s4 = inlined_call_operand.vmem [shape: f32[1,128], index: 4, kind: input, shape index: {}]
  %s5 = inlined_call_operand.vmem [shape: bf16[128,128], index: 5, kind: input, shape index: {}]
  %s6 = inlined_call_operand.vmem [shape: f32[1,128], index: 6, kind: input, shape index: {}]
  %s7 = inlined_call_operand.vmem [shape: f32[512,16], index: 7, kind: output, shape index: {}]
  %s8 = sld [smem:[#allocation0]]
  $region38: #{fused_forward.1} parent=0
    _
  %s10 = ssub.s32 1, %s8
  %s11 = scalar_select 0, %s10, %s8
  // Predicated region
  $region2: #{fused_forward.1} parent=0 // pred_check
    _
  $region3: #{fused_forward.1} parent=0 // pred_check_branch
    %13 = sbr.rel (0) target = $region5
  $region4: #{fused_forward.1} parent=0 // pred_region
    _
  $region5: #{fused_forward.1} parent=0 // pred_fallthru
    _
  // Predicated region
  $region6: #{fused_forward.1} parent=0 // pred_check
    _
  $region7: #{fused_forward.1} parent=0 // pred_check_branch
    %15 = sbr.rel (0) target = $region9
  $region8: #{fused_forward.1} parent=0 // pred_region
    _
  $region9: #{fused_forward.1} parent=0 // pred_fallthru
    _
  // Predicated region
  $region10: #{fused_forward.1} parent=0 // pred_check
    _
  $region11: #{fused_forward.1} parent=0 // pred_check_branch
    %17 = sbr.rel (0) target = $region13
  $region12: #{fused_forward.1} parent=0 // pred_region
    _
  $region13: #{fused_forward.1} parent=0 // pred_fallthru
    _
  // Predicated region
  $region14: #{fused_forward.1} parent=0 // pred_check
    _
  $region15: #{fused_forward.1} parent=0 // pred_check_branch
    %19 = sbr.rel (0) target = $region17
  $region16: #{fused_forward.1} parent=0 // pred_region
    _
  $region17: #{fused_forward.1} parent=0 // pred_fallthru
    _
  // Predicated region
  $region18: #{fused_forward.1} parent=0 // pred_check
    _
  $region19: #{fused_forward.1} parent=0 // pred_check_branch
    %21 = sbr.rel (0) target = $region21
  $region20: #{fused_forward.1} parent=0 // pred_region
    _
  $region21: #{fused_forward.1} parent=0 // pred_fallthru
    _
  // Predicated region
  $region22: #{fused_forward.1} parent=0 // pred_check
    _
  $region23: #{fused_forward.1} parent=0 // pred_check_branch
    %23 = sbr.rel (0) target = $region25
  $region24: #{fused_forward.1} parent=0 // pred_region
    _
  $region25: #{fused_forward.1} parent=0 // pred_fallthru
    _
  // Predicated region
  $region26: #{fused_forward.1} parent=0 // pred_check
    _
  $region27: #{fused_forward.1} parent=0 // pred_check_branch
    %25 = sbr.rel (0) target = $region29
  $region28: #{fused_forward.1} parent=0 // pred_region
    _
  $region29: #{fused_forward.1} parent=0 // pred_fallthru
    _
  %v27 = vld [vmem:[%s0] sm:$0xff]
  %v28 = vld [vmem:[%s0 + $0x8] sm:$0xff]
  %v29 = vld [vmem:[%s0 + $0x10] sm:$0xff]
  %v30 = vld [vmem:[%s0 + $0x18] sm:$0xff]
  %v31 = vld [vmem:[%s0 + $0x20] sm:$0xff]
  %v32 = vld [vmem:[%s0 + $0x28] sm:$0xff]
  %v33 = vld [vmem:[%s0 + $0x30] sm:$0xff]
  %v34 = vld [vmem:[%s0 + $0x38] sm:$0xff]
  %v35 = vld [vmem:[%s0 + $0x40] sm:$0xff]
  %v36 = vld [vmem:[%s0 + $0x48] sm:$0xff]
  %v37 = vld [vmem:[%s0 + $0x50] sm:$0xff]
  %v38 = vld [vmem:[%s0 + $0x58] sm:$0xff]
  %v39 = vld [vmem:[%s0 + $0x60] sm:$0xff]
  %v40 = vld [vmem:[%s0 + $0x68] sm:$0xff]
  %v41 = vld [vmem:[%s0 + $0x70] sm:$0xff]
  %v42 = vld [vmem:[%s0 + $0x78] sm:$0xff]
  %v43 = vld [vmem:[%s0 + $0x80] sm:$0xff]
  %v44 = vld [vmem:[%s0 + $0x88] sm:$0xff]
  %v45 = vld [vmem:[%s0 + $0x90] sm:$0xff]
  %v46 = vld [vmem:[%s0 + $0x98] sm:$0xff]
  %v47 = vld [vmem:[%s0 + $0xa0] sm:$0xff]
  %v48 = vld [vmem:[%s0 + $0xa8] sm:$0xff]
  %v49 = vld [vmem:[%s0 + $0xb0] sm:$0xff]
  %v50 = vld [vmem:[%s0 + $0xb8] sm:$0xff]
  %v51 = vld [vmem:[%s0 + $0xc0] sm:$0xff]
  %v52 = vld [vmem:[%s0 + $0xc8] sm:$0xff]
  %v53 = vld [vmem:[%s0 + $0xd0] sm:$0xff]
  %v54 = vld [vmem:[%s0 + $0xd8] sm:$0xff]
  %v55 = vld [vmem:[%s0 + $0xe0] sm:$0xff]
  %v56 = vld [vmem:[%s0 + $0xe8] sm:$0xff]
  %v57 = vld [vmem:[%s0 + $0xf0] sm:$0xff]
  %v58 = vld [vmem:[%s0 + $0xf8] sm:$0xff]
  %v59 = vld [vmem:[%s0 + $0x100] sm:$0xff]
  %v60 = vld [vmem:[%s0 + $0x108] sm:$0xff]
  %v61 = vld [vmem:[%s0 + $0x110] sm:$0xff]
  %v62 = vld [vmem:[%s0 + $0x118] sm:$0xff]
  %v63 = vld [vmem:[%s0 + $0x120] sm:$0xff]
  %v64 = vld [vmem:[%s0 + $0x128] sm:$0xff]
  %v65 = vld [vmem:[%s0 + $0x130] sm:$0xff]
  %v66 = vld [vmem:[%s0 + $0x138] sm:$0xff]
  %v67 = vld [vmem:[%s0 + $0x140] sm:$0xff]
  %v68 = vld [vmem:[%s0 + $0x148] sm:$0xff]
  %v69 = vld [vmem:[%s0 + $0x150] sm:$0xff]
  %v70 = vld [vmem:[%s0 + $0x158] sm:$0xff]
  %v71 = vld [vmem:[%s0 + $0x160] sm:$0xff]
  %v72 = vld [vmem:[%s0 + $0x168] sm:$0xff]
  %v73 = vld [vmem:[%s0 + $0x170] sm:$0xff]
  %v74 = vld [vmem:[%s0 + $0x178] sm:$0xff]
  %v75 = vld [vmem:[%s0 + $0x180] sm:$0xff]
  %v76 = vld [vmem:[%s0 + $0x188] sm:$0xff]
  %v77 = vld [vmem:[%s0 + $0x190] sm:$0xff]
  %v78 = vld [vmem:[%s0 + $0x198] sm:$0xff]
  %v79 = vld [vmem:[%s0 + $0x1a0] sm:$0xff]
  %v80 = vld [vmem:[%s0 + $0x1a8] sm:$0xff]
  %v81 = vld [vmem:[%s0 + $0x1b0] sm:$0xff]
  %v82 = vld [vmem:[%s0 + $0x1b8] sm:$0xff]
  %v83 = vld [vmem:[%s0 + $0x1c0] sm:$0xff]
  %v84 = vld [vmem:[%s0 + $0x1c8] sm:$0xff]
  %v85 = vld [vmem:[%s0 + $0x1d0] sm:$0xff]
  %v86 = vld [vmem:[%s0 + $0x1d8] sm:$0xff]
  %v87 = vld [vmem:[%s0 + $0x1e0] sm:$0xff]
  %v88 = vld [vmem:[%s0 + $0x1e8] sm:$0xff]
  %v89 = vld [vmem:[%s0 + $0x1f0] sm:$0xff]
  %v90 = vld [vmem:[%s0 + $0x1f8] sm:$0xff]
  %vm91 = vcmp.ne.f32.partialorder %v27, %v27
  %vm92 = vcmp.ne.f32.partialorder %v28, %v28
  %vm93 = vcmp.ne.f32.partialorder %v29, %v29
  %vm94 = vcmp.ne.f32.partialorder %v30, %v30
  %vm95 = vcmp.ne.f32.partialorder %v31, %v31
  %vm96 = vcmp.ne.f32.partialorder %v32, %v32
  %vm97 = vcmp.ne.f32.partialorder %v33, %v33
  %vm98 = vcmp.ne.f32.partialorder %v34, %v34
  %vm99 = vcmp.ne.f32.partialorder %v35, %v35
  %vm100 = vcmp.ne.f32.partialorder %v36, %v36
  %vm101 = vcmp.ne.f32.partialorder %v37, %v37
  %vm102 = vcmp.ne.f32.partialorder %v38, %v38
  %vm103 = vcmp.ne.f32.partialorder %v39, %v39
  %vm104 = vcmp.ne.f32.partialorder %v40, %v40
  %vm105 = vcmp.ne.f32.partialorder %v41, %v41
  %vm106 = vcmp.ne.f32.partialorder %v42, %v42
  %vm107 = vcmp.ne.f32.partialorder %v43, %v43
  %vm108 = vcmp.ne.f32.partialorder %v44, %v44
  %vm109 = vcmp.ne.f32.partialorder %v45, %v45
  %vm110 = vcmp.ne.f32.partialorder %v46, %v46
  %vm111 = vcmp.ne.f32.partialorder %v47, %v47
  %vm112 = vcmp.ne.f32.partialorder %v48, %v48
  %vm113 = vcmp.ne.f32.partialorder %v49, %v49
  %vm114 = vcmp.ne.f32.partialorder %v50, %v50
  %vm115 = vcmp.ne.f32.partialorder %v51, %v51
  %vm116 = vcmp.ne.f32.partialorder %v52, %v52
  %vm117 = vcmp.ne.f32.partialorder %v53, %v53
  %vm118 = vcmp.ne.f32.partialorder %v54, %v54
  %vm119 = vcmp.ne.f32.partialorder %v55, %v55
  %vm120 = vcmp.ne.f32.partialorder %v56, %v56
  %vm121 = vcmp.ne.f32.partialorder %v57, %v57
  %vm122 = vcmp.ne.f32.partialorder %v58, %v58
  %vm123 = vcmp.ne.f32.partialorder %v59, %v59
  %vm124 = vcmp.ne.f32.partialorder %v60, %v60
  %vm125 = vcmp.ne.f32.partialorder %v61, %v61
  %vm126 = vcmp.ne.f32.partialorder %v62, %v62
  %vm127 = vcmp.ne.f32.partialorder %v63, %v63
  %vm128 = vcmp.ne.f32.partialorder %v64, %v64
  %vm129 = vcmp.ne.f32.partialorder %v65, %v65
  %vm130 = vcmp.ne.f32.partialorder %v66, %v66
  %vm131 = vcmp.ne.f32.partialorder %v67, %v67
  %vm132 = vcmp.ne.f32.partialorder %v68, %v68
  %vm133 = vcmp.ne.f32.partialorder %v69, %v69
  %vm134 = vcmp.ne.f32.partialorder %v70, %v70
  %vm135 = vcmp.ne.f32.partialorder %v71, %v71
  %vm136 = vcmp.ne.f32.partialorder %v72, %v72
  %vm137 = vcmp.ne.f32.partialorder %v73, %v73
  %vm138 = vcmp.ne.f32.partialorder %v74, %v74
  %vm139 = vcmp.ne.f32.partialorder %v75, %v75
  %vm140 = vcmp.ne.f32.partialorder %v76, %v76
  %vm141 = vcmp.ne.f32.partialorder %v77, %v77
  %vm142 = vcmp.ne.f32.partialorder %v78, %v78
  %vm143 = vcmp.ne.f32.partialorder %v79, %v79
  %vm144 = vcmp.ne.f32.partialorder %v80, %v80
  %vm145 = vcmp.ne.f32.partialorder %v81, %v81
  %vm146 = vcmp.ne.f32.partialorder %v82, %v82
  %vm147 = vcmp.ne.f32.partialorder %v83, %v83
  %vm148 = vcmp.ne.f32.partialorder %v84, %v84
  %vm149 = vcmp.ne.f32.partialorder %v85, %v85
  %vm150 = vcmp.ne.f32.partialorder %v86, %v86
  %vm151 = vcmp.ne.f32.partialorder %v87, %v87
  %vm152 = vcmp.ne.f32.partialorder %v88, %v88
  %vm153 = vcmp.ne.f32.partialorder %v89, %v89
  %vm154 = vcmp.ne.f32.partialorder %v90, %v90
  %v155 = vsel %vm91, 0.0, %v27
  %v156 = vsel %vm92, 0.0, %v28
  %v157 = vsel %vm93, 0.0, %v29
  %v158 = vsel %vm94, 0.0, %v30
  %v159 = vsel %vm95, 0.0, %v31
  %v160 = vsel %vm96, 0.0, %v32
  %v161 = vsel %vm97, 0.0, %v33
  %v162 = vsel %vm98, 0.0, %v34
  %v163 = vsel %vm99, 0.0, %v35
  %v164 = vsel %vm100, 0.0, %v36
  %v165 = vsel %vm101, 0.0, %v37
  %v166 = vsel %vm102, 0.0, %v38
  %v167 = vsel %vm103, 0.0, %v39
  %v168 = vsel %vm104, 0.0, %v40
  %v169 = vsel %vm105, 0.0, %v41
  %v170 = vsel %vm106, 0.0, %v42
  %v171 = vsel %vm107, 0.0, %v43
  %v172 = vsel %vm108, 0.0, %v44
  %v173 = vsel %vm109, 0.0, %v45
  %v174 = vsel %vm110, 0.0, %v46
  %v175 = vsel %vm111, 0.0, %v47
  %v176 = vsel %vm112, 0.0, %v48
  %v177 = vsel %vm113, 0.0, %v49
  %v178 = vsel %vm114, 0.0, %v50
  %v179 = vsel %vm115, 0.0, %v51
  %v180 = vsel %vm116, 0.0, %v52
  %v181 = vsel %vm117, 0.0, %v53
  %v182 = vsel %vm118, 0.0, %v54
  %v183 = vsel %vm119, 0.0, %v55
  %v184 = vsel %vm120, 0.0, %v56
  %v185 = vsel %vm121, 0.0, %v57
  %v186 = vsel %vm122, 0.0, %v58
  %v187 = vsel %vm123, 0.0, %v59
  %v188 = vsel %vm124, 0.0, %v60
  %v189 = vsel %vm125, 0.0, %v61
  %v190 = vsel %vm126, 0.0, %v62
  %v191 = vsel %vm127, 0.0, %v63
  %v192 = vsel %vm128, 0.0, %v64
  %v193 = vsel %vm129, 0.0, %v65
  %v194 = vsel %vm130, 0.0, %v66
  %v195 = vsel %vm131, 0.0, %v67
  %v196 = vsel %vm132, 0.0, %v68
  %v197 = vsel %vm133, 0.0, %v69
  %v198 = vsel %vm134, 0.0, %v70
  %v199 = vsel %vm135, 0.0, %v71
  %v200 = vsel %vm136, 0.0, %v72
  %v201 = vsel %vm137, 0.0, %v73
  %v202 = vsel %vm138, 0.0, %v74
  %v203 = vsel %vm139, 0.0, %v75
  %v204 = vsel %vm140, 0.0, %v76
  %v205 = vsel %vm141, 0.0, %v77
  %v206 = vsel %vm142, 0.0, %v78
  %v207 = vsel %vm143, 0.0, %v79
  %v208 = vsel %vm144, 0.0, %v80
  %v209 = vsel %vm145, 0.0, %v81
  %v210 = vsel %vm146, 0.0, %v82
  %v211 = vsel %vm147, 0.0, %v83
  %v212 = vsel %vm148, 0.0, %v84
  %v213 = vsel %vm149, 0.0, %v85
  %v214 = vsel %vm150, 0.0, %v86
  %v215 = vsel %vm151, 0.0, %v87
  %v216 = vsel %vm152, 0.0, %v88
  %v217 = vsel %vm153, 0.0, %v89
  %v218 = vsel %vm154, 0.0, %v90
  %219 = vst [vmem:[#allocation2] sm:$0xff] 0.0
  %220 = vst [vmem:[#allocation2 + $0x8] sm:$0xff] 0.0
  %221 = vst [vmem:[#allocation2 + $0x10] sm:$0xff] 0.0
  %222 = vst [vmem:[#allocation2 + $0x18] sm:$0xff] 0.0
  %223 = vst [vmem:[#allocation2 + $0x20] sm:$0xff] 0.0
  %224 = vst [vmem:[#allocation2 + $0x28] sm:$0xff] 0.0
  %225 = vst [vmem:[#allocation2 + $0x30] sm:$0xff] 0.0
  %226 = vst [vmem:[#allocation2 + $0x38] sm:$0xff] 0.0
  %227 = vst [vmem:[#allocation2 + $0x40] sm:$0xff] 0.0
  %228 = vst [vmem:[#allocation2 + $0x48] sm:$0xff] 0.0
  %229 = vst [vmem:[#allocation2 + $0x50] sm:$0xff] 0.0
  %230 = vst [vmem:[#allocation2 + $0x58] sm:$0xff] 0.0
  %231 = vst [vmem:[#allocation2 + $0x60] sm:$0xff] 0.0
  %232 = vst [vmem:[#allocation2 + $0x68] sm:$0xff] 0.0
  %233 = vst [vmem:[#allocation2 + $0x70] sm:$0xff] 0.0
  %234 = vst [vmem:[#allocation2 + $0x78] sm:$0xff] 0.0
  %235 = vst [vmem:[#allocation2 + $0x80] sm:$0xff] 0.0
  %236 = vst [vmem:[#allocation2 + $0x88] sm:$0xff] 0.0
  %237 = vst [vmem:[#allocation2 + $0x90] sm:$0xff] 0.0
  %238 = vst [vmem:[#allocation2 + $0x98] sm:$0xff] 0.0
  %239 = vst [vmem:[#allocation2 + $0xa0] sm:$0xff] 0.0
  %240 = vst [vmem:[#allocation2 + $0xa8] sm:$0xff] 0.0
  %241 = vst [vmem:[#allocation2 + $0xb0] sm:$0xff] 0.0
  %242 = vst [vmem:[#allocation2 + $0xb8] sm:$0xff] 0.0
  %243 = vst [vmem:[#allocation2 + $0xc0] sm:$0xff] 0.0
  %244 = vst [vmem:[#allocation2 + $0xc8] sm:$0xff] 0.0
  %245 = vst [vmem:[#allocation2 + $0xd0] sm:$0xff] 0.0
  %246 = vst [vmem:[#allocation2 + $0xd8] sm:$0xff] 0.0
  %247 = vst [vmem:[#allocation2 + $0xe0] sm:$0xff] 0.0
  %248 = vst [vmem:[#allocation2 + $0xe8] sm:$0xff] 0.0
  %249 = vst [vmem:[#allocation2 + $0xf0] sm:$0xff] 0.0
  %250 = vst [vmem:[#allocation2 + $0xf8] sm:$0xff] 0.0
  %251 = vst [vmem:[#allocation2 + $0x100] sm:$0xff] 0.0
  %252 = vst [vmem:[#allocation2 + $0x108] sm:$0xff] 0.0
  %253 = vst [vmem:[#allocation2 + $0x110] sm:$0xff] 0.0
  %254 = vst [vmem:[#allocation2 + $0x118] sm:$0xff] 0.0
  %255 = vst [vmem:[#allocation2 + $0x120] sm:$0xff] 0.0
  %256 = vst [vmem:[#allocation2 + $0x128] sm:$0xff] 0.0
  %257 = vst [vmem:[#allocation2 + $0x130] sm:$0xff] 0.0
  %258 = vst [vmem:[#allocation2 + $0x138] sm:$0xff] 0.0
  %259 = vst [vmem:[#allocation2 + $0x140] sm:$0xff] 0.0
  %260 = vst [vmem:[#allocation2 + $0x148] sm:$0xff] 0.0
  %261 = vst [vmem:[#allocation2 + $0x150] sm:$0xff] 0.0
  %262 = vst [vmem:[#allocation2 + $0x158] sm:$0xff] 0.0
  %263 = vst [vmem:[#allocation2 + $0x160] sm:$0xff] 0.0
  %264 = vst [vmem:[#allocation2 + $0x168] sm:$0xff] 0.0
  %265 = vst [vmem:[#allocation2 + $0x170] sm:$0xff] 0.0
  %266 = vst [vmem:[#allocation2 + $0x178] sm:$0xff] 0.0
  %267 = vst [vmem:[#allocation2 + $0x180] sm:$0xff] 0.0
  %268 = vst [vmem:[#allocation2 + $0x188] sm:$0xff] 0.0
  %269 = vst [vmem:[#allocation2 + $0x190] sm:$0xff] 0.0
  %270 = vst [vmem:[#allocation2 + $0x198] sm:$0xff] 0.0
  %271 = vst [vmem:[#allocation2 + $0x1a0] sm:$0xff] 0.0
  %272 = vst [vmem:[#allocation2 + $0x1a8] sm:$0xff] 0.0
  %273 = vst [vmem:[#allocation2 + $0x1b0] sm:$0xff] 0.0
  %274 = vst [vmem:[#allocation2 + $0x1b8] sm:$0xff] 0.0
  %275 = vst [vmem:[#allocation2 + $0x1c0] sm:$0xff] 0.0
  %276 = vst [vmem:[#allocation2 + $0x1c8] sm:$0xff] 0.0
  %277 = vst [vmem:[#allocation2 + $0x1d0] sm:$0xff] 0.0
  %278 = vst [vmem:[#allocation2 + $0x1d8] sm:$0xff] 0.0
  %279 = vst [vmem:[#allocation2 + $0x1e0] sm:$0xff] 0.0
  %280 = vst [vmem:[#allocation2 + $0x1e8] sm:$0xff] 0.0
  %281 = vst [vmem:[#allocation2 + $0x1f0] sm:$0xff] 0.0
  %282 = vst [vmem:[#allocation2 + $0x1f8] sm:$0xff] 0.0
  %vm283 = vcmask 31744
  %284 = vst.msk [vmem:[#allocation2] sm:$0xff] %vm283, %v155
  %285 = vst.msk [vmem:[#allocation2 + $0x8] sm:$0xff] %vm283, %v156
  %286 = vst.msk [vmem:[#allocation2 + $0x10] sm:$0xff] %vm283, %v157
  %287 = vst.msk [vmem:[#allocation2 + $0x18] sm:$0xff] %vm283, %v158
  %288 = vst.msk [vmem:[#allocation2 + $0x20] sm:$0xff] %vm283, %v159
  %289 = vst.msk [vmem:[#allocation2 + $0x28] sm:$0xff] %vm283, %v160
  %290 = vst.msk [vmem:[#allocation2 + $0x30] sm:$0xff] %vm283, %v161
  %291 = vst.msk [vmem:[#allocation2 + $0x38] sm:$0xff] %vm283, %v162
  %292 = vst.msk [vmem:[#allocation2 + $0x40] sm:$0xff] %vm283, %v163
  %293 = vst.msk [vmem:[#allocation2 + $0x48] sm:$0xff] %vm283, %v164
  %294 = vst.msk [vmem:[#allocation2 + $0x50] sm:$0xff] %vm283, %v165
  %295 = vst.msk [vmem:[#allocation2 + $0x58] sm:$0xff] %vm283, %v166
  %296 = vst.msk [vmem:[#allocation2 + $0x60] sm:$0xff] %vm283, %v167
  %297 = vst.msk [vmem:[#allocation2 + $0x68] sm:$0xff] %vm283, %v168
  %298 = vst.msk [vmem:[#allocation2 + $0x70] sm:$0xff] %vm283, %v169
  %299 = vst.msk [vmem:[#allocation2 + $0x78] sm:$0xff] %vm283, %v170
  %300 = vst.msk [vmem:[#allocation2 + $0x80] sm:$0xff] %vm283, %v171
  %301 = vst.msk [vmem:[#allocation2 + $0x88] sm:$0xff] %vm283, %v172
  %302 = vst.msk [vmem:[#allocation2 + $0x90] sm:$0xff] %vm283, %v173
  %303 = vst.msk [vmem:[#allocation2 + $0x98] sm:$0xff] %vm283, %v174
  %304 = vst.msk [vmem:[#allocation2 + $0xa0] sm:$0xff] %vm283, %v175
  %305 = vst.msk [vmem:[#allocation2 + $0xa8] sm:$0xff] %vm283, %v176
  %306 = vst.msk [vmem:[#allocation2 + $0xb0] sm:$0xff] %vm283, %v177
  %307 = vst.msk [vmem:[#allocation2 + $0xb8] sm:$0xff] %vm283, %v178
  %308 = vst.msk [vmem:[#allocation2 + $0xc0] sm:$0xff] %vm283, %v179
  %309 = vst.msk [vmem:[#allocation2 + $0xc8] sm:$0xff] %vm283, %v180
  %310 = vst.msk [vmem:[#allocation2 + $0xd0] sm:$0xff] %vm283, %v181
  %311 = vst.msk [vmem:[#allocation2 + $0xd8] sm:$0xff] %vm283, %v182
  %312 = vst.msk [vmem:[#allocation2 + $0xe0] sm:$0xff] %vm283, %v183
  %313 = vst.msk [vmem:[#allocation2 + $0xe8] sm:$0xff] %vm283, %v184
  %314 = vst.msk [vmem:[#allocation2 + $0xf0] sm:$0xff] %vm283, %v185
  %315 = vst.msk [vmem:[#allocation2 + $0xf8] sm:$0xff] %vm283, %v186
  %316 = vst.msk [vmem:[#allocation2 + $0x100] sm:$0xff] %vm283, %v187
  %317 = vst.msk [vmem:[#allocation2 + $0x108] sm:$0xff] %vm283, %v188
  %318 = vst.msk [vmem:[#allocation2 + $0x110] sm:$0xff] %vm283, %v189
  %319 = vst.msk [vmem:[#allocation2 + $0x118] sm:$0xff] %vm283, %v190
  %320 = vst.msk [vmem:[#allocation2 + $0x120] sm:$0xff] %vm283, %v191
  %321 = vst.msk [vmem:[#allocation2 + $0x128] sm:$0xff] %vm283, %v192
  %322 = vst.msk [vmem:[#allocation2 + $0x130] sm:$0xff] %vm283, %v193
  %323 = vst.msk [vmem:[#allocation2 + $0x138] sm:$0xff] %vm283, %v194
  %324 = vst.msk [vmem:[#allocation2 + $0x140] sm:$0xff] %vm283, %v195
  %325 = vst.msk [vmem:[#allocation2 + $0x148] sm:$0xff] %vm283, %v196
  %326 = vst.msk [vmem:[#allocation2 + $0x150] sm:$0xff] %vm283, %v197
  %327 = vst.msk [vmem:[#allocation2 + $0x158] sm:$0xff] %vm283, %v198
  %328 = vst.msk [vmem:[#allocation2 + $0x160] sm:$0xff] %vm283, %v199
  %329 = vst.msk [vmem:[#allocation2 + $0x168] sm:$0xff] %vm283, %v200
  %330 = vst.msk [vmem:[#allocation2 + $0x170] sm:$0xff] %vm283, %v201
  %331 = vst.msk [vmem:[#allocation2 + $0x178] sm:$0xff] %vm283, %v202
  %332 = vst.msk [vmem:[#allocation2 + $0x180] sm:$0xff] %vm283, %v203
  %333 = vst.msk [vmem:[#allocation2 + $0x188] sm:$0xff] %vm283, %v204
  %334 = vst.msk [vmem:[#allocation2 + $0x190] sm:$0xff] %vm283, %v205
  %335 = vst.msk [vmem:[#allocation2 + $0x198] sm:$0xff] %vm283, %v206
  %336 = vst.msk [vmem:[#allocation2 + $0x1a0] sm:$0xff] %vm283, %v207
  %337 = vst.msk [vmem:[#allocation2 + $0x1a8] sm:$0xff] %vm283, %v208
  %338 = vst.msk [vmem:[#allocation2 + $0x1b0] sm:$0xff] %vm283, %v209
  %339 = vst.msk [vmem:[#allocation2 + $0x1b8] sm:$0xff] %vm283, %v210
  %340 = vst.msk [vmem:[#allocation2 + $0x1c0] sm:$0xff] %vm283, %v211
  %341 = vst.msk [vmem:[#allocation2 + $0x1c8] sm:$0xff] %vm283, %v212
  %342 = vst.msk [vmem:[#allocation2 + $0x1d0] sm:$0xff] %vm283, %v213
  %343 = vst.msk [vmem:[#allocation2 + $0x1d8] sm:$0xff] %vm283, %v214
  %344 = vst.msk [vmem:[#allocation2 + $0x1e0] sm:$0xff] %vm283, %v215
  %345 = vst.msk [vmem:[#allocation2 + $0x1e8] sm:$0xff] %vm283, %v216
  %346 = vst.msk [vmem:[#allocation2 + $0x1f0] sm:$0xff] %vm283, %v217
  %347 = vst.msk [vmem:[#allocation2 + $0x1f8] sm:$0xff] %vm283, %v218
  %v348 = vld [vmem:[#allocation2] sm:$0xff]
  %v349 = vld [vmem:[#allocation2 + $0x8] sm:$0xff]
  %v350 = vld [vmem:[#allocation2 + $0x10] sm:$0xff]
  %v351 = vld [vmem:[#allocation2 + $0x18] sm:$0xff]
  %v352 = vld [vmem:[#allocation2 + $0x20] sm:$0xff]
  %v353 = vld [vmem:[#allocation2 + $0x28] sm:$0xff]
  %v354 = vld [vmem:[#allocation2 + $0x30] sm:$0xff]
  %v355 = vld [vmem:[#allocation2 + $0x38] sm:$0xff]
  %v356 = vld [vmem:[#allocation2 + $0x40] sm:$0xff]
  %v357 = vld [vmem:[#allocation2 + $0x48] sm:$0xff]
  %v358 = vld [vmem:[#allocation2 + $0x50] sm:$0xff]
  %v359 = vld [vmem:[#allocation2 + $0x58] sm:$0xff]
  %v360 = vld [vmem:[#allocation2 + $0x60] sm:$0xff]
  %v361 = vld [vmem:[#allocation2 + $0x68] sm:$0xff]
  %v362 = vld [vmem:[#allocation2 + $0x70] sm:$0xff]
  %v363 = vld [vmem:[#allocation2 + $0x78] sm:$0xff]
  %v364 = vld [vmem:[#allocation2 + $0x80] sm:$0xff]
  %v365 = vld [vmem:[#allocation2 + $0x88] sm:$0xff]
  %v366 = vld [vmem:[#allocation2 + $0x90] sm:$0xff]
  %v367 = vld [vmem:[#allocation2 + $0x98] sm:$0xff]
  %v368 = vld [vmem:[#allocation2 + $0xa0] sm:$0xff]
  %v369 = vld [vmem:[#allocation2 + $0xa8] sm:$0xff]
  %v370 = vld [vmem:[#allocation2 + $0xb0] sm:$0xff]
  %v371 = vld [vmem:[#allocation2 + $0xb8] sm:$0xff]
  %v372 = vld [vmem:[#allocation2 + $0xc0] sm:$0xff]
  %v373 = vld [vmem:[#allocation2 + $0xc8] sm:$0xff]
  %v374 = vld [vmem:[#allocation2 + $0xd0] sm:$0xff]
  %v375 = vld [vmem:[#allocation2 + $0xd8] sm:$0xff]
  %v376 = vld [vmem:[#allocation2 + $0xe0] sm:$0xff]
  %v377 = vld [vmem:[#allocation2 + $0xe8] sm:$0xff]
  %v378 = vld [vmem:[#allocation2 + $0xf0] sm:$0xff]
  %v379 = vld [vmem:[#allocation2 + $0xf8] sm:$0xff]
  %v380 = vld [vmem:[#allocation2 + $0x100] sm:$0xff]
  %v381 = vld [vmem:[#allocation2 + $0x108] sm:$0xff]
  %v382 = vld [vmem:[#allocation2 + $0x110] sm:$0xff]
  %v383 = vld [vmem:[#allocation2 + $0x118] sm:$0xff]
  %v384 = vld [vmem:[#allocation2 + $0x120] sm:$0xff]
  %v385 = vld [vmem:[#allocation2 + $0x128] sm:$0xff]
  %v386 = vld [vmem:[#allocation2 + $0x130] sm:$0xff]
  %v387 = vld [vmem:[#allocation2 + $0x138] sm:$0xff]
  %v388 = vld [vmem:[#allocation2 + $0x140] sm:$0xff]
  %v389 = vld [vmem:[#allocation2 + $0x148] sm:$0xff]
  %v390 = vld [vmem:[#allocation2 + $0x150] sm:$0xff]
  %v391 = vld [vmem:[#allocation2 + $0x158] sm:$0xff]
  %v392 = vld [vmem:[#allocation2 + $0x160] sm:$0xff]
  %v393 = vld [vmem:[#allocation2 + $0x168] sm:$0xff]
  %v394 = vld [vmem:[#allocation2 + $0x170] sm:$0xff]
  %v395 = vld [vmem:[#allocation2 + $0x178] sm:$0xff]
  %v396 = vld [vmem:[#allocation2 + $0x180] sm:$0xff]
  %v397 = vld [vmem:[#allocation2 + $0x188] sm:$0xff]
  %v398 = vld [vmem:[#allocation2 + $0x190] sm:$0xff]
  %v399 = vld [vmem:[#allocation2 + $0x198] sm:$0xff]
  %v400 = vld [vmem:[#allocation2 + $0x1a0] sm:$0xff]
  %v401 = vld [vmem:[#allocation2 + $0x1a8] sm:$0xff]
  %v402 = vld [vmem:[#allocation2 + $0x1b0] sm:$0xff]
  %v403 = vld [vmem:[#allocation2 + $0x1b8] sm:$0xff]
  %v404 = vld [vmem:[#allocation2 + $0x1c0] sm:$0xff]
  %v405 = vld [vmem:[#allocation2 + $0x1c8] sm:$0xff]
  %v406 = vld [vmem:[#allocation2 + $0x1d0] sm:$0xff]
  %v407 = vld [vmem:[#allocation2 + $0x1d8] sm:$0xff]
  %v408 = vld [vmem:[#allocation2 + $0x1e0] sm:$0xff]
  %v409 = vld [vmem:[#allocation2 + $0x1e8] sm:$0xff]
  %v410 = vld [vmem:[#allocation2 + $0x1f0] sm:$0xff]
  %v411 = vld [vmem:[#allocation2 + $0x1f8] sm:$0xff]
  %v412 = vpack.c.bf16 %v349, %v348
  %v413 = vpack.c.bf16 %v351, %v350
  %v414 = vpack.c.bf16 %v353, %v352
  %v415 = vpack.c.bf16 %v355, %v354
  %v416 = vpack.c.bf16 %v357, %v356
  %v417 = vpack.c.bf16 %v359, %v358
  %v418 = vpack.c.bf16 %v361, %v360
  %v419 = vpack.c.bf16 %v363, %v362
  %v420 = vpack.c.bf16 %v365, %v364
  %v421 = vpack.c.bf16 %v367, %v366
  %v422 = vpack.c.bf16 %v369, %v368
  %v423 = vpack.c.bf16 %v371, %v370
  %v424 = vpack.c.bf16 %v373, %v372
  %v425 = vpack.c.bf16 %v375, %v374
  %v426 = vpack.c.bf16 %v377, %v376
  %v427 = vpack.c.bf16 %v379, %v378
  %v428 = vpack.c.bf16 %v381, %v380
  %v429 = vpack.c.bf16 %v383, %v382
  %v430 = vpack.c.bf16 %v385, %v384
  %v431 = vpack.c.bf16 %v387, %v386
  %v432 = vpack.c.bf16 %v389, %v388
  %v433 = vpack.c.bf16 %v391, %v390
  %v434 = vpack.c.bf16 %v393, %v392
  %v435 = vpack.c.bf16 %v395, %v394
  %v436 = vpack.c.bf16 %v397, %v396
  %v437 = vpack.c.bf16 %v399, %v398
  %v438 = vpack.c.bf16 %v401, %v400
  %v439 = vpack.c.bf16 %v403, %v402
  %v440 = vpack.c.bf16 %v405, %v404
  %v441 = vpack.c.bf16 %v407, %v406
  %v442 = vpack.c.bf16 %v409, %v408
  %v443 = vpack.c.bf16 %v411, %v410
  %v444 = vld [vmem:[%s1] sm:$0xf]
  %v445 = vld [vmem:[%s1 + $0x4] sm:$0xf]
  %v446 = vld [vmem:[%s1 + $0x8] sm:$0xf]
  %v447 = vld [vmem:[%s1 + $0xc] sm:$0xf]
  %v448 = vld [vmem:[%s1 + $0x10] sm:$0xf]
  %v449 = vld [vmem:[%s1 + $0x14] sm:$0xf]
  %v450 = vld [vmem:[%s1 + $0x18] sm:$0xf]
  %v451 = vld [vmem:[%s1 + $0x1c] sm:$0xf]
  %v452 = vld [vmem:[%s1 + $0x20] sm:$0xf]
  %v453 = vld [vmem:[%s1 + $0x24] sm:$0xf]
  %v454 = vld [vmem:[%s1 + $0x28] sm:$0xf]
  %v455 = vld [vmem:[%s1 + $0x2c] sm:$0xf]
  %v456 = vld [vmem:[%s1 + $0x30] sm:$0xf]
  %v457 = vld [vmem:[%s1 + $0x34] sm:$0xf]
  %v458 = vld [vmem:[%s1 + $0x38] sm:$0xf]
  %v459 = vld [vmem:[%s1 + $0x3c] sm:$0xf]
  %v460 = vld [vmem:[%s2] sm:$0x1]
  %v462 = vlaneseq
  %v463 = vshrl.u32 %v462, 7
  %v464 = vsub.s32 0, %v463
  %v465 = vrot.slane %v460, %v464
  %v483 = vunpack.c.l.b16 %v444
  %v484 = vunpack.c.l.b16 %v445
  %v485 = vunpack.c.l.b16 %v446
  %v486 = vunpack.c.l.b16 %v447
  %v487 = vunpack.c.l.b16 %v448
  %v488 = vunpack.c.l.b16 %v449
  %v489 = vunpack.c.l.b16 %v450
  %v490 = vunpack.c.l.b16 %v451
  %v491 = vunpack.c.l.b16 %v452
  %v492 = vunpack.c.l.b16 %v453
  %v493 = vunpack.c.l.b16 %v454
  %v494 = vunpack.c.l.b16 %v455
  %v495 = vunpack.c.l.b16 %v456
  %v496 = vunpack.c.l.b16 %v457
  %v497 = vunpack.c.l.b16 %v458
  %v498 = vunpack.c.l.b16 %v459
  %v499 = vpack.c.b16 %v484, %v483
  %v500 = vpack.c.b16 %v486, %v485
  %v501 = vpack.c.b16 %v488, %v487
  %v502 = vpack.c.b16 %v490, %v489
  %v503 = vpack.c.b16 %v492, %v491
  %v504 = vpack.c.b16 %v494, %v493
  %v505 = vpack.c.b16 %v496, %v495
  %v506 = vpack.c.b16 %v498, %v497
  %515 = vmatprep.subr.bf16.mxu0 0
  %516 = vmatpush1.bf16.msra.mxu0 %v499
  %517 = vmatprep.subr.bf16.mxu0 0
  %518 = vmatpush1.bf16.msra.mxu0 %v500
  %519 = vmatprep.subr.bf16.mxu0 0
  %520 = vmatpush1.bf16.msra.mxu0 %v501
  %521 = vmatprep.subr.bf16.mxu0 0
  %522 = vmatpush1.bf16.msra.mxu0 %v502
  %523 = vmatprep.subr.bf16.mxu0 0
  %524 = vmatpush1.bf16.msra.mxu0 %v503
  %525 = vmatprep.subr.bf16.mxu0 0
  %526 = vmatpush1.bf16.msra.mxu0 %v504
  %527 = vmatprep.subr.bf16.mxu0 0
  %528 = vmatpush1.bf16.msra.mxu0 %v505
  %529 = vmatprep.subr.bf16.mxu0 0
  %530 = vmatpush1.bf16.msra.mxu0 %v506
  %531 = vmatprep.subr.bf16.mxu0 0
  %532 = vmatpush1.bf16.msra.mxu0 0
  %533 = vmatprep.subr.bf16.mxu0 0
  %534 = vmatpush1.bf16.msra.mxu0 0
  %535 = vmatprep.subr.bf16.mxu0 0
  %536 = vmatpush1.bf16.msra.mxu0 0
  %537 = vmatprep.subr.bf16.mxu0 0
  %538 = vmatpush1.bf16.msra.mxu0 0
  %539 = vmatprep.subr.bf16.mxu0 0
  %540 = vmatpush1.bf16.msra.mxu0 0
  %541 = vmatprep.subr.bf16.mxu0 0
  %542 = vmatpush1.bf16.msra.mxu0 0
  %543 = vmatprep.subr.bf16.mxu0 0
  %544 = vmatpush1.bf16.msra.mxu0 0
  %545 = vmatprep.subr.bf16.mxu0 0
  %546 = vmatpush1.bf16.msra.mxu0 0
  %547 = vmatprep.mubr.bf16.mxu0 0
  %548 = vmatmul.mubr.bf16.gmra.mrb[0].mxu0 %v412
  %v549 = vpop.f32.mrb[0].mxu0
  %v550 = vadd.f32 %v465, %v549
  %v551 = vpop.f32.mrb[0].mxu0
  %v552 = vpop.f32.mrb[0].mxu0
  %v553 = vadd.f32 %v465, %v552
  %v554 = vpop.f32.mrb[0].mxu0
  %555 = vmatprep.mubr.bf16.mxu0 0
  %556 = vmatmul.mubr.bf16.gmra.mrb[0].mxu0 %v413
  %v557 = vpop.f32.mrb[0].mxu0
  %v558 = vadd.f32 %v465, %v557
  %v559 = vpop.f32.mrb[0].mxu0
  %v560 = vpop.f32.mrb[0].mxu0
  %v561 = vadd.f32 %v465, %v560
  %v562 = vpop.f32.mrb[0].mxu0
  %563 = vmatprep.mubr.bf16.mxu0 0
  %564 = vmatmul.mubr.bf16.gmra.mrb[0].mxu0 %v414
  %v565 = vpop.f32.mrb[0].mxu0
  %v566 = vadd.f32 %v465, %v565
  %v567 = vpop.f32.mrb[0].mxu0
  %v568 = vpop.f32.mrb[0].mxu0
  %v569 = vadd.f32 %v465, %v568
  %v570 = vpop.f32.mrb[0].mxu0
  %571 = vmatprep.mubr.bf16.mxu0 0
  %572 = vmatmul.mubr.bf16.gmra.mrb[0].mxu0 %v415
  %v573 = vpop.f32.mrb[0].mxu0
  %v574 = vadd.f32 %v465, %v573
  %v575 = vpop.f32.mrb[0].mxu0
  %v576 = vpop.f32.mrb[0].mxu0
  %v577 = vadd.f32 %v465, %v576
  %v578 = vpop.f32.mrb[0].mxu0
  %579 = vmatprep.mubr.bf16.mxu0 0
  %580 = vmatmul.mubr.bf16.gmra.mrb[0].mxu0 %v416
  %v581 = vpop.f32.mrb[0].mxu0
  %v582 = vadd.f32 %v465, %v581
  %v583 = vpop.f32.mrb[0].mxu0
  %v584 = vpop.f32.mrb[0].mxu0
  %v585 = vadd.f32 %v465, %v584
  %v586 = vpop.f32.mrb[0].mxu0
  %587 = vmatprep.mubr.bf16.mxu0 0
  %588 = vmatmul.mubr.bf16.gmra.mrb[0].mxu0 %v417
  %v589 = vpop.f32.mrb[0].mxu0
  %v590 = vadd.f32 %v465, %v589
  %v591 = vpop.f32.mrb[0].mxu0
  %v592 = vpop.f32.mrb[0].mxu0
  %v593 = vadd.f32 %v465, %v592
  %v594 = vpop.f32.mrb[0].mxu0
  %595 = vmatprep.mubr.bf16.mxu0 0
  %596 = vmatmul.mubr.bf16.gmra.mrb[0].mxu0 %v418
  %v597 = vpop.f32.mrb[0].mxu0
  %v598 = vadd.f32 %v465, %v597
  %v599 = vpop.f32.mrb[0].mxu0
  %v600 = vpop.f32.mrb[0].mxu0
  %v601 = vadd.f32 %v465, %v600
  %v602 = vpop.f32.mrb[0].mxu0
  %603 = vmatprep.mubr.bf16.mxu0 0
  %604 = vmatmul.mubr.bf16.gmra.mrb[0].mxu0 %v419
  %v605 = vpop.f32.mrb[0].mxu0
  %v606 = vadd.f32 %v465, %v605
  %v607 = vpop.f32.mrb[0].mxu0
  %v608 = vpop.f32.mrb[0].mxu0
  %v609 = vadd.f32 %v465, %v608
  %v610 = vpop.f32.mrb[0].mxu0
  %611 = vmatprep.mubr.bf16.mxu0 0
  %612 = vmatmul.mubr.bf16.gmra.mrb[0].mxu0 %v420
  %v613 = vpop.f32.mrb[0].mxu0
  %v614 = vadd.f32 %v465, %v613
  %v615 = vpop.f32.mrb[0].mxu0
  %v616 = vpop.f32.mrb[0].mxu0
  %v617 = vadd.f32 %v465, %v616
  %v618 = vpop.f32.mrb[0].mxu0
  %619 = vmatprep.mubr.bf16.mxu0 0
  %620 = vmatmul.mubr.bf16.gmra.mrb[0].mxu0 %v421
  %v621 = vpop.f32.mrb[0].mxu0
  %v622 = vadd.f32 %v465, %v621
  %v623 = vpop.f32.mrb[0].mxu0
  %v624 = vpop.f32.mrb[0].mxu0
  %v625 = vadd.f32 %v465, %v624
  %v626 = vpop.f32.mrb[0].mxu0
  %627 = vmatprep.mubr.bf16.mxu0 0
  %628 = vmatmul.mubr.bf16.gmra.mrb[0].mxu0 %v422
  %v629 = vpop.f32.mrb[0].mxu0
  %v630 = vadd.f32 %v465, %v629
  %v631 = vpop.f32.mrb[0].mxu0
  %v632 = vpop.f32.mrb[0].mxu0
  %v633 = vadd.f32 %v465, %v632
  %v634 = vpop.f32.mrb[0].mxu0
  %635 = vmatprep.mubr.bf16.mxu0 0
  %636 = vmatmul.mubr.bf16.gmra.mrb[0].mxu0 %v423
  %v637 = vpop.f32.mrb[0].mxu0
  %v638 = vadd.f32 %v465, %v637
  %v639 = vpop.f32.mrb[0].mxu0
  %v640 = vpop.f32.mrb[0].mxu0
  %v641 = vadd.f32 %v465, %v640
  %v642 = vpop.f32.mrb[0].mxu0
  %643 = vmatprep.mubr.bf16.mxu0 0
  %644 = vmatmul.mubr.bf16.gmra.mrb[0].mxu0 %v424
  %v645 = vpop.f32.mrb[0].mxu0
  %v646 = vadd.f32 %v465, %v645
  %v647 = vpop.f32.mrb[0].mxu0
  %v648 = vpop.f32.mrb[0].mxu0
  %v649 = vadd.f32 %v465, %v648
  %v650 = vpop.f32.mrb[0].mxu0
  %651 = vmatprep.mubr.bf16.mxu0 0
  %652 = vmatmul.mubr.bf16.gmra.mrb[0].mxu0 %v425
  %v653 = vpop.f32.mrb[0].mxu0
  %v654 = vadd.f32 %v465, %v653
  %v655 = vpop.f32.mrb[0].mxu0
  %v656 = vpop.f32.mrb[0].mxu0
  %v657 = vadd.f32 %v465, %v656
  %v658 = vpop.f32.mrb[0].mxu0
  %659 = vmatprep.mubr.bf16.mxu0 0
  %660 = vmatmul.mubr.bf16.gmra.mrb[0].mxu0 %v426
  %v661 = vpop.f32.mrb[0].mxu0
  %v662 = vadd.f32 %v465, %v661
  %v663 = vpop.f32.mrb[0].mxu0
  %v664 = vpop.f32.mrb[0].mxu0
  %v665 = vadd.f32 %v465, %v664
  %v666 = vpop.f32.mrb[0].mxu0
  %667 = vmatprep.mubr.bf16.mxu0 0
  %668 = vmatmul.mubr.bf16.gmra.mrb[0].mxu0 %v427
  %v669 = vpop.f32.mrb[0].mxu0
  %v670 = vadd.f32 %v465, %v669
  %v671 = vpop.f32.mrb[0].mxu0
  %v672 = vpop.f32.mrb[0].mxu0
  %v673 = vadd.f32 %v465, %v672
  %v674 = vpop.f32.mrb[0].mxu0
  %675 = vmatprep.mubr.bf16.mxu0 0
  %676 = vmatmul.mubr.bf16.gmra.mrb[0].mxu0 %v428
  %v677 = vpop.f32.mrb[0].mxu0
  %v678 = vadd.f32 %v465, %v677
  %v679 = vpop.f32.mrb[0].mxu0
  %v680 = vpop.f32.mrb[0].mxu0
  %v681 = vadd.f32 %v465, %v680
  %v682 = vpop.f32.mrb[0].mxu0
  %683 = vmatprep.mubr.bf16.mxu0 0
  %684 = vmatmul.mubr.bf16.gmra.mrb[0].mxu0 %v429
  %v685 = vpop.f32.mrb[0].mxu0
  %v686 = vadd.f32 %v465, %v685
  %v687 = vpop.f32.mrb[0].mxu0
  %v688 = vpop.f32.mrb[0].mxu0
  %v689 = vadd.f32 %v465, %v688
  %v690 = vpop.f32.mrb[0].mxu0
  %691 = vmatprep.mubr.bf16.mxu0 0
  %692 = vmatmul.mubr.bf16.gmra.mrb[0].mxu0 %v430
  %v693 = vpop.f32.mrb[0].mxu0
  %v694 = vadd.f32 %v465, %v693
  %v695 = vpop.f32.mrb[0].mxu0
  %v696 = vpop.f32.mrb[0].mxu0
  %v697 = vadd.f32 %v465, %v696
  %v698 = vpop.f32.mrb[0].mxu0
  %699 = vmatprep.mubr.bf16.mxu0 0
  %700 = vmatmul.mubr.bf16.gmra.mrb[0].mxu0 %v431
  %v701 = vpop.f32.mrb[0].mxu0
  %v702 = vadd.f32 %v465, %v701
  %v703 = vpop.f32.mrb[0].mxu0
  %v704 = vpop.f32.mrb[0].mxu0
  %v705 = vadd.f32 %v465, %v704
  %v706 = vpop.f32.mrb[0].mxu0
  %707 = vmatprep.mubr.bf16.mxu0 0
  %708 = vmatmul.mubr.bf16.gmra.mrb[0].mxu0 %v432
  %v709 = vpop.f32.mrb[0].mxu0
  %v710 = vadd.f32 %v465, %v709
  %v711 = vpop.f32.mrb[0].mxu0
  %v712 = vpop.f32.mrb[0].mxu0
  %v713 = vadd.f32 %v465, %v712
  %v714 = vpop.f32.mrb[0].mxu0
  %715 = vmatprep.mubr.bf16.mxu0 0
  %716 = vmatmul.mubr.bf16.gmra.mrb[0].mxu0 %v433
  %v717 = vpop.f32.mrb[0].mxu0
  %v718 = vadd.f32 %v465, %v717
  %v719 = vpop.f32.mrb[0].mxu0
  %v720 = vpop.f32.mrb[0].mxu0
  %v721 = vadd.f32 %v465, %v720
  %v722 = vpop.f32.mrb[0].mxu0
  %723 = vmatprep.mubr.bf16.mxu0 0
  %724 = vmatmul.mubr.bf16.gmra.mrb[0].mxu0 %v434
  %v725 = vpop.f32.mrb[0].mxu0
  %v726 = vadd.f32 %v465, %v725
  %v727 = vpop.f32.mrb[0].mxu0
  %v728 = vpop.f32.mrb[0].mxu0
  %v729 = vadd.f32 %v465, %v728
  %v730 = vpop.f32.mrb[0].mxu0
  %731 = vmatprep.mubr.bf16.mxu0 0
  %732 = vmatmul.mubr.bf16.gmra.mrb[0].mxu0 %v435
  %v733 = vpop.f32.mrb[0].mxu0
  %v734 = vadd.f32 %v465, %v733
  %v735 = vpop.f32.mrb[0].mxu0
  %v736 = vpop.f32.mrb[0].mxu0
  %v737 = vadd.f32 %v465, %v736
  %v738 = vpop.f32.mrb[0].mxu0
  %739 = vmatprep.mubr.bf16.mxu0 0
  %740 = vmatmul.mubr.bf16.gmra.mrb[0].mxu0 %v436
  %v741 = vpop.f32.mrb[0].mxu0
  %v742 = vadd.f32 %v465, %v741
  %v743 = vpop.f32.mrb[0].mxu0
  %v744 = vpop.f32.mrb[0].mxu0
  %v745 = vadd.f32 %v465, %v744
  %v746 = vpop.f32.mrb[0].mxu0
  %747 = vmatprep.mubr.bf16.mxu0 0
  %748 = vmatmul.mubr.bf16.gmra.mrb[0].mxu0 %v437
  %v749 = vpop.f32.mrb[0].mxu0
  %v750 = vadd.f32 %v465, %v749
  %v751 = vpop.f32.mrb[0].mxu0
  %v752 = vpop.f32.mrb[0].mxu0
  %v753 = vadd.f32 %v465, %v752
  %v754 = vpop.f32.mrb[0].mxu0
  %755 = vmatprep.mubr.bf16.mxu0 0
  %756 = vmatmul.mubr.bf16.gmra.mrb[0].mxu0 %v438
  %v757 = vpop.f32.mrb[0].mxu0
  %v758 = vadd.f32 %v465, %v757
  %v759 = vpop.f32.mrb[0].mxu0
  %v760 = vpop.f32.mrb[0].mxu0
  %v761 = vadd.f32 %v465, %v760
  %v762 = vpop.f32.mrb[0].mxu0
  %763 = vmatprep.mubr.bf16.mxu0 0
  %764 = vmatmul.mubr.bf16.gmra.mrb[0].mxu0 %v439
  %v765 = vpop.f32.mrb[0].mxu0
  %v766 = vadd.f32 %v465, %v765
  %v767 = vpop.f32.mrb[0].mxu0
  %v768 = vpop.f32.mrb[0].mxu0
  %v769 = vadd.f32 %v465, %v768
  %v770 = vpop.f32.mrb[0].mxu0
  %771 = vmatprep.mubr.bf16.mxu0 0
  %772 = vmatmul.mubr.bf16.gmra.mrb[0].mxu0 %v440
  %v773 = vpop.f32.mrb[0].mxu0
  %v774 = vadd.f32 %v465, %v773
  %v775 = vpop.f32.mrb[0].mxu0
  %v776 = vpop.f32.mrb[0].mxu0
  %v777 = vadd.f32 %v465, %v776
  %v778 = vpop.f32.mrb[0].mxu0
  %779 = vmatprep.mubr.bf16.mxu0 0
  %780 = vmatmul.mubr.bf16.gmra.mrb[0].mxu0 %v441
  %v781 = vpop.f32.mrb[0].mxu0
  %v782 = vadd.f32 %v465, %v781
  %v783 = vpop.f32.mrb[0].mxu0
  %v784 = vpop.f32.mrb[0].mxu0
  %v785 = vadd.f32 %v465, %v784
  %v786 = vpop.f32.mrb[0].mxu0
  %787 = vmatprep.mubr.bf16.mxu0 0
  %788 = vmatmul.mubr.bf16.gmra.mrb[0].mxu0 %v442
  %v789 = vpop.f32.mrb[0].mxu0
  %v790 = vadd.f32 %v465, %v789
  %v791 = vpop.f32.mrb[0].mxu0
  %v792 = vpop.f32.mrb[0].mxu0
  %v793 = vadd.f32 %v465, %v792
  %v794 = vpop.f32.mrb[0].mxu0
  %795 = vmatprep.mubr.bf16.mxu0 0
  %796 = vmatmul.mubr.bf16.gmra.mrb[0].mxu0 %v443
  %v797 = vpop.f32.mrb[0].mxu0
  %v798 = vadd.f32 %v465, %v797
  %v799 = vpop.f32.mrb[0].mxu0
  %v800 = vpop.f32.mrb[0].mxu0
  %v801 = vadd.f32 %v465, %v800
  %v802 = vpop.f32.mrb[0].mxu0
  %803 = vdwg.mxu0
  %v804 = vmul.f32 %v550, 0.2
  %v805 = vmul.f32 %v553, 0.2
  %v806 = vmul.f32 %v558, 0.2
  %v807 = vmul.f32 %v561, 0.2
  %v808 = vmul.f32 %v566, 0.2
  %v809 = vmul.f32 %v569, 0.2
  %v810 = vmul.f32 %v574, 0.2
  %v811 = vmul.f32 %v577, 0.2
  %v812 = vmul.f32 %v582, 0.2
  %v813 = vmul.f32 %v585, 0.2
  %v814 = vmul.f32 %v590, 0.2
  %v815 = vmul.f32 %v593, 0.2
  %v816 = vmul.f32 %v598, 0.2
  %v817 = vmul.f32 %v601, 0.2
  %v818 = vmul.f32 %v606, 0.2
  %v819 = vmul.f32 %v609, 0.2
  %v820 = vmul.f32 %v614, 0.2
  %v821 = vmul.f32 %v617, 0.2
  %v822 = vmul.f32 %v622, 0.2
  %v823 = vmul.f32 %v625, 0.2
  %v824 = vmul.f32 %v630, 0.2
  %v825 = vmul.f32 %v633, 0.2
  %v826 = vmul.f32 %v638, 0.2
  %v827 = vmul.f32 %v641, 0.2
  %v828 = vmul.f32 %v646, 0.2
  %v829 = vmul.f32 %v649, 0.2
  %v830 = vmul.f32 %v654, 0.2
  %v831 = vmul.f32 %v657, 0.2
  %v832 = vmul.f32 %v662, 0.2
  %v833 = vmul.f32 %v665, 0.2
  %v834 = vmul.f32 %v670, 0.2
  %v835 = vmul.f32 %v673, 0.2
  %v836 = vmul.f32 %v678, 0.2
  %v837 = vmul.f32 %v681, 0.2
  %v838 = vmul.f32 %v686, 0.2
  %v839 = vmul.f32 %v689, 0.2
  %v840 = vmul.f32 %v694, 0.2
  %v841 = vmul.f32 %v697, 0.2
  %v842 = vmul.f32 %v702, 0.2
  %v843 = vmul.f32 %v705, 0.2
  %v844 = vmul.f32 %v710, 0.2
  %v845 = vmul.f32 %v713, 0.2
  %v846 = vmul.f32 %v718, 0.2
  %v847 = vmul.f32 %v721, 0.2
  %v848 = vmul.f32 %v726, 0.2
  %v849 = vmul.f32 %v729, 0.2
  %v850 = vmul.f32 %v734, 0.2
  %v851 = vmul.f32 %v737, 0.2
  %v852 = vmul.f32 %v742, 0.2
  %v853 = vmul.f32 %v745, 0.2
  %v854 = vmul.f32 %v750, 0.2
  %v855 = vmul.f32 %v753, 0.2
  %v856 = vmul.f32 %v758, 0.2
  %v857 = vmul.f32 %v761, 0.2
  %v858 = vmul.f32 %v766, 0.2
  %v859 = vmul.f32 %v769, 0.2
  %v860 = vmul.f32 %v774, 0.2
  %v861 = vmul.f32 %v777, 0.2
  %v862 = vmul.f32 %v782, 0.2
  %v863 = vmul.f32 %v785, 0.2
  %v864 = vmul.f32 %v790, 0.2
  %v865 = vmul.f32 %v793, 0.2
  %v866 = vmul.f32 %v798, 0.2
  %v867 = vmul.f32 %v801, 0.2
  %v868 = vmax.f32 %v550, %v804
  %v869 = vmax.f32 %v553, %v805
  %v870 = vmax.f32 %v558, %v806
  %v871 = vmax.f32 %v561, %v807
  %v872 = vmax.f32 %v566, %v808
  %v873 = vmax.f32 %v569, %v809
  %v874 = vmax.f32 %v574, %v810
  %v875 = vmax.f32 %v577, %v811
  %v876 = vmax.f32 %v582, %v812
  %v877 = vmax.f32 %v585, %v813
  %v878 = vmax.f32 %v590, %v814
  %v879 = vmax.f32 %v593, %v815
  %v880 = vmax.f32 %v598, %v816
  %v881 = vmax.f32 %v601, %v817
  %v882 = vmax.f32 %v606, %v818
  %v883 = vmax.f32 %v609, %v819
  %v884 = vmax.f32 %v614, %v820
  %v885 = vmax.f32 %v617, %v821
  %v886 = vmax.f32 %v622, %v822
  %v887 = vmax.f32 %v625, %v823
  %v888 = vmax.f32 %v630, %v824
  %v889 = vmax.f32 %v633, %v825
  %v890 = vmax.f32 %v638, %v826
  %v891 = vmax.f32 %v641, %v827
  %v892 = vmax.f32 %v646, %v828
  %v893 = vmax.f32 %v649, %v829
  %v894 = vmax.f32 %v654, %v830
  %v895 = vmax.f32 %v657, %v831
  %v896 = vmax.f32 %v662, %v832
  %v897 = vmax.f32 %v665, %v833
  %v898 = vmax.f32 %v670, %v834
  %v899 = vmax.f32 %v673, %v835
  %v900 = vmax.f32 %v678, %v836
  %v901 = vmax.f32 %v681, %v837
  %v902 = vmax.f32 %v686, %v838
  %v903 = vmax.f32 %v689, %v839
  %v904 = vmax.f32 %v694, %v840
  %v905 = vmax.f32 %v697, %v841
  %v906 = vmax.f32 %v702, %v842
  %v907 = vmax.f32 %v705, %v843
  %v908 = vmax.f32 %v710, %v844
  %v909 = vmax.f32 %v713, %v845
  %v910 = vmax.f32 %v718, %v846
  %v911 = vmax.f32 %v721, %v847
  %v912 = vmax.f32 %v726, %v848
  %v913 = vmax.f32 %v729, %v849
  %v914 = vmax.f32 %v734, %v850
  %v915 = vmax.f32 %v737, %v851
  %v916 = vmax.f32 %v742, %v852
  %v917 = vmax.f32 %v745, %v853
  %v918 = vmax.f32 %v750, %v854
  %v919 = vmax.f32 %v753, %v855
  %v920 = vmax.f32 %v758, %v856
  %v921 = vmax.f32 %v761, %v857
  %v922 = vmax.f32 %v766, %v858
  %v923 = vmax.f32 %v769, %v859
  %v924 = vmax.f32 %v774, %v860
  %v925 = vmax.f32 %v777, %v861
  %v926 = vmax.f32 %v782, %v862
  %v927 = vmax.f32 %v785, %v863
  %v928 = vmax.f32 %v790, %v864
  %v929 = vmax.f32 %v793, %v865
  %v930 = vmax.f32 %v798, %v866
  %v931 = vmax.f32 %v801, %v867
  %v932 = vpack.c.bf16 %v869, %v868
  %v933 = vpack.c.bf16 %v871, %v870
  %v934 = vpack.c.bf16 %v873, %v872
  %v935 = vpack.c.bf16 %v875, %v874
  %v936 = vpack.c.bf16 %v877, %v876
  %v937 = vpack.c.bf16 %v879, %v878
  %v938 = vpack.c.bf16 %v881, %v880
  %v939 = vpack.c.bf16 %v883, %v882
  %v940 = vpack.c.bf16 %v885, %v884
  %v941 = vpack.c.bf16 %v887, %v886
  %v942 = vpack.c.bf16 %v889, %v888
  %v943 = vpack.c.bf16 %v891, %v890
  %v944 = vpack.c.bf16 %v893, %v892
  %v945 = vpack.c.bf16 %v895, %v894
  %v946 = vpack.c.bf16 %v897, %v896
  %v947 = vpack.c.bf16 %v899, %v898
  %v948 = vpack.c.bf16 %v901, %v900
  %v949 = vpack.c.bf16 %v903, %v902
  %v950 = vpack.c.bf16 %v905, %v904
  %v951 = vpack.c.bf16 %v907, %v906
  %v952 = vpack.c.bf16 %v909, %v908
  %v953 = vpack.c.bf16 %v911, %v910
  %v954 = vpack.c.bf16 %v913, %v912
  %v955 = vpack.c.bf16 %v915, %v914
  %v956 = vpack.c.bf16 %v917, %v916
  %v957 = vpack.c.bf16 %v919, %v918
  %v958 = vpack.c.bf16 %v921, %v920
  %v959 = vpack.c.bf16 %v923, %v922
  %v960 = vpack.c.bf16 %v925, %v924
  %v961 = vpack.c.bf16 %v927, %v926
  %v962 = vpack.c.bf16 %v929, %v928
  %v963 = vpack.c.bf16 %v931, %v930
  %v964 = vld [vmem:[%s3] sm:$0xf]
  %v965 = vld [vmem:[%s3 + $0x4] sm:$0xf]
  %v966 = vld [vmem:[%s3 + $0x8] sm:$0xf]
  %v967 = vld [vmem:[%s3 + $0xc] sm:$0xf]
  %v968 = vld [vmem:[%s3 + $0x10] sm:$0xf]
  %v969 = vld [vmem:[%s3 + $0x14] sm:$0xf]
  %v970 = vld [vmem:[%s3 + $0x18] sm:$0xf]
  %v971 = vld [vmem:[%s3 + $0x1c] sm:$0xf]
  %v972 = vld [vmem:[%s3 + $0x20] sm:$0xf]
  %v973 = vld [vmem:[%s3 + $0x24] sm:$0xf]
  %v974 = vld [vmem:[%s3 + $0x28] sm:$0xf]
  %v975 = vld [vmem:[%s3 + $0x2c] sm:$0xf]
  %v976 = vld [vmem:[%s3 + $0x30] sm:$0xf]
  %v977 = vld [vmem:[%s3 + $0x34] sm:$0xf]
  %v978 = vld [vmem:[%s3 + $0x38] sm:$0xf]
  %v979 = vld [vmem:[%s3 + $0x3c] sm:$0xf]
  %v980 = vld [vmem:[%s4] sm:$0x1]
  %v982 = vlaneseq
  %v983 = vshrl.u32 %v982, 7
  %v984 = vsub.s32 0, %v983
  %v985 = vrot.slane %v980, %v984
  %v1003 = vunpack.c.l.b16 %v964
  %v1004 = vunpack.c.l.b16 %v965
  %v1005 = vunpack.c.l.b16 %v966
  %v1006 = vunpack.c.l.b16 %v967
  %v1007 = vunpack.c.l.b16 %v968
  %v1008 = vunpack.c.l.b16 %v969
  %v1009 = vunpack.c.l.b16 %v970
  %v1010 = vunpack.c.l.b16 %v971
  %v1011 = vunpack.c.l.b16 %v972
  %v1012 = vunpack.c.l.b16 %v973
  %v1013 = vunpack.c.l.b16 %v974
  %v1014 = vunpack.c.l.b16 %v975
  %v1015 = vunpack.c.l.b16 %v976
  %v1016 = vunpack.c.l.b16 %v977
  %v1017 = vunpack.c.l.b16 %v978
  %v1018 = vunpack.c.l.b16 %v979
  %v1019 = vpack.c.b16 %v1004, %v1003
  %v1020 = vpack.c.b16 %v1006, %v1005
  %v1021 = vpack.c.b16 %v1008, %v1007
  %v1022 = vpack.c.b16 %v1010, %v1009
  %v1023 = vpack.c.b16 %v1012, %v1011
  %v1024 = vpack.c.b16 %v1014, %v1013
  %v1025 = vpack.c.b16 %v1016, %v1015
  %v1026 = vpack.c.b16 %v1018, %v1017
  %1035 = vmatprep.subr.bf16.mxu0 0
  %1036 = vmatpush1.bf16.msra.mxu0 %v1019
  %1037 = vmatprep.subr.bf16.mxu0 0
  %1038 = vmatpush1.bf16.msra.mxu0 %v1020
  %1039 = vmatprep.subr.bf16.mxu0 0
  %1040 = vmatpush1.bf16.msra.mxu0 %v1021
  %1041 = vmatprep.subr.bf16.mxu0 0
  %1042 = vmatpush1.bf16.msra.mxu0 %v1022
  %1043 = vmatprep.subr.bf16.mxu0 0
  %1044 = vmatpush1.bf16.msra.mxu0 %v1023
  %1045 = vmatprep.subr.bf16.mxu0 0
  %1046 = vmatpush1.bf16.msra.mxu0 %v1024
  %1047 = vmatprep.subr.bf16.mxu0 0
  %1048 = vmatpush1.bf16.msra.mxu0 %v1025
  %1049 = vmatprep.subr.bf16.mxu0 0
  %1050 = vmatpush1.bf16.msra.mxu0 %v1026
  %1051 = vmatprep.subr.bf16.mxu0 0
  %1052 = vmatpush1.bf16.msra.mxu0 0
  %1053 = vmatprep.subr.bf16.mxu0 0
  %1054 = vmatpush1.bf16.msra.mxu0 0
  %1055 = vmatprep.subr.bf16.mxu0 0
  %1056 = vmatpush1.bf16.msra.mxu0 0
  %1057 = vmatprep.subr.bf16.mxu0 0
  %1058 = vmatpush1.bf16.msra.mxu0 0
  %1059 = vmatprep.subr.bf16.mxu0 0
  %1060 = vmatpush1.bf16.msra.mxu0 0
  %1061 = vmatprep.subr.bf16.mxu0 0
  %1062 = vmatpush1.bf16.msra.mxu0 0
  %1063 = vmatprep.subr.bf16.mxu0 0
  %1064 = vmatpush1.bf16.msra.mxu0 0
  %1065 = vmatprep.subr.bf16.mxu0 0
  %1066 = vmatpush1.bf16.msra.mxu0 0
  %1067 = vmatprep.mubr.bf16.mxu0 0
  %1068 = vmatmul.mubr.bf16.gmra.mrb[0].mxu0 %v932
  %v1069 = vpop.f32.mrb[0].mxu0
  %v1070 = vadd.f32 %v985, %v1069
  %v1071 = vpop.f32.mrb[0].mxu0
  %v1072 = vpop.f32.mrb[0].mxu0
  %v1073 = vadd.f32 %v985, %v1072
  %v1074 = vpop.f32.mrb[0].mxu0
  %1075 = vmatprep.mubr.bf16.mxu0 0
  %1076 = vmatmul.mubr.bf16.gmra.mrb[0].mxu0 %v933
  %v1077 = vpop.f32.mrb[0].mxu0
  %v1078 = vadd.f32 %v985, %v1077
  %v1079 = vpop.f32.mrb[0].mxu0
  %v1080 = vpop.f32.mrb[0].mxu0
  %v1081 = vadd.f32 %v985, %v1080
  %v1082 = vpop.f32.mrb[0].mxu0
  %1083 = vmatprep.mubr.bf16.mxu0 0
  %1084 = vmatmul.mubr.bf16.gmra.mrb[0].mxu0 %v934
  %v1085 = vpop.f32.mrb[0].mxu0
  %v1086 = vadd.f32 %v985, %v1085
  %v1087 = vpop.f32.mrb[0].mxu0
  %v1088 = vpop.f32.mrb[0].mxu0
  %v1089 = vadd.f32 %v985, %v1088
  %v1090 = vpop.f32.mrb[0].mxu0
  %1091 = vmatprep.mubr.bf16.mxu0 0
  %1092 = vmatmul.mubr.bf16.gmra.mrb[0].mxu0 %v935
  %v1093 = vpop.f32.mrb[0].mxu0
  %v1094 = vadd.f32 %v985, %v1093
  %v1095 = vpop.f32.mrb[0].mxu0
  %v1096 = vpop.f32.mrb[0].mxu0
  %v1097 = vadd.f32 %v985, %v1096
  %v1098 = vpop.f32.mrb[0].mxu0
  %1099 = vmatprep.mubr.bf16.mxu0 0
  %1100 = vmatmul.mubr.bf16.gmra.mrb[0].mxu0 %v936
  %v1101 = vpop.f32.mrb[0].mxu0
  %v1102 = vadd.f32 %v985, %v1101
  %v1103 = vpop.f32.mrb[0].mxu0
  %v1104 = vpop.f32.mrb[0].mxu0
  %v1105 = vadd.f32 %v985, %v1104
  %v1106 = vpop.f32.mrb[0].mxu0
  %1107 = vmatprep.mubr.bf16.mxu0 0
  %1108 = vmatmul.mubr.bf16.gmra.mrb[0].mxu0 %v937
  %v1109 = vpop.f32.mrb[0].mxu0
  %v1110 = vadd.f32 %v985, %v1109
  %v1111 = vpop.f32.mrb[0].mxu0
  %v1112 = vpop.f32.mrb[0].mxu0
  %v1113 = vadd.f32 %v985, %v1112
  %v1114 = vpop.f32.mrb[0].mxu0
  %1115 = vmatprep.mubr.bf16.mxu0 0
  %1116 = vmatmul.mubr.bf16.gmra.mrb[0].mxu0 %v938
  %v1117 = vpop.f32.mrb[0].mxu0
  %v1118 = vadd.f32 %v985, %v1117
  %v1119 = vpop.f32.mrb[0].mxu0
  %v1120 = vpop.f32.mrb[0].mxu0
  %v1121 = vadd.f32 %v985, %v1120
  %v1122 = vpop.f32.mrb[0].mxu0
  %1123 = vmatprep.mubr.bf16.mxu0 0
  %1124 = vmatmul.mubr.bf16.gmra.mrb[0].mxu0 %v939
  %v1125 = vpop.f32.mrb[0].mxu0
  %v1126 = vadd.f32 %v985, %v1125
  %v1127 = vpop.f32.mrb[0].mxu0
  %v1128 = vpop.f32.mrb[0].mxu0
  %v1129 = vadd.f32 %v985, %v1128
  %v1130 = vpop.f32.mrb[0].mxu0
  %1131 = vmatprep.mubr.bf16.mxu0 0
  %1132 = vmatmul.mubr.bf16.gmra.mrb[0].mxu0 %v940
  %v1133 = vpop.f32.mrb[0].mxu0
  %v1134 = vadd.f32 %v985, %v1133
  %v1135 = vpop.f32.mrb[0].mxu0
  %v1136 = vpop.f32.mrb[0].mxu0
  %v1137 = vadd.f32 %v985, %v1136
  %v1138 = vpop.f32.mrb[0].mxu0
  %1139 = vmatprep.mubr.bf16.mxu0 0
  %1140 = vmatmul.mubr.bf16.gmra.mrb[0].mxu0 %v941
  %v1141 = vpop.f32.mrb[0].mxu0
  %v1142 = vadd.f32 %v985, %v1141
  %v1143 = vpop.f32.mrb[0].mxu0
  %v1144 = vpop.f32.mrb[0].mxu0
  %v1145 = vadd.f32 %v985, %v1144
  %v1146 = vpop.f32.mrb[0].mxu0
  %1147 = vmatprep.mubr.bf16.mxu0 0
  %1148 = vmatmul.mubr.bf16.gmra.mrb[0].mxu0 %v942
  %v1149 = vpop.f32.mrb[0].mxu0
  %v1150 = vadd.f32 %v985, %v1149
  %v1151 = vpop.f32.mrb[0].mxu0
  %v1152 = vpop.f32.mrb[0].mxu0
  %v1153 = vadd.f32 %v985, %v1152
  %v1154 = vpop.f32.mrb[0].mxu0
  %1155 = vmatprep.mubr.bf16.mxu0 0
  %1156 = vmatmul.mubr.bf16.gmra.mrb[0].mxu0 %v943
  %v1157 = vpop.f32.mrb[0].mxu0
  %v1158 = vadd.f32 %v985, %v1157
  %v1159 = vpop.f32.mrb[0].mxu0
  %v1160 = vpop.f32.mrb[0].mxu0
  %v1161 = vadd.f32 %v985, %v1160
  %v1162 = vpop.f32.mrb[0].mxu0
  %1163 = vmatprep.mubr.bf16.mxu0 0
  %1164 = vmatmul.mubr.bf16.gmra.mrb[0].mxu0 %v944
  %v1165 = vpop.f32.mrb[0].mxu0
  %v1166 = vadd.f32 %v985, %v1165
  %v1167 = vpop.f32.mrb[0].mxu0
  %v1168 = vpop.f32.mrb[0].mxu0
  %v1169 = vadd.f32 %v985, %v1168
  %v1170 = vpop.f32.mrb[0].mxu0
  %1171 = vmatprep.mubr.bf16.mxu0 0
  %1172 = vmatmul.mubr.bf16.gmra.mrb[0].mxu0 %v945
  %v1173 = vpop.f32.mrb[0].mxu0
  %v1174 = vadd.f32 %v985, %v1173
  %v1175 = vpop.f32.mrb[0].mxu0
  %v1176 = vpop.f32.mrb[0].mxu0
  %v1177 = vadd.f32 %v985, %v1176
  %v1178 = vpop.f32.mrb[0].mxu0
  %1179 = vmatprep.mubr.bf16.mxu0 0
  %1180 = vmatmul.mubr.bf16.gmra.mrb[0].mxu0 %v946
  %v1181 = vpop.f32.mrb[0].mxu0
  %v1182 = vadd.f32 %v985, %v1181
  %v1183 = vpop.f32.mrb[0].mxu0
  %v1184 = vpop.f32.mrb[0].mxu0
  %v1185 = vadd.f32 %v985, %v1184
  %v1186 = vpop.f32.mrb[0].mxu0
  %1187 = vmatprep.mubr.bf16.mxu0 0
  %1188 = vmatmul.mubr.bf16.gmra.mrb[0].mxu0 %v947
  %v1189 = vpop.f32.mrb[0].mxu0
  %v1190 = vadd.f32 %v985, %v1189
  %v1191 = vpop.f32.mrb[0].mxu0
  %v1192 = vpop.f32.mrb[0].mxu0
  %v1193 = vadd.f32 %v985, %v1192
  %v1194 = vpop.f32.mrb[0].mxu0
  %1195 = vmatprep.mubr.bf16.mxu0 0
  %1196 = vmatmul.mubr.bf16.gmra.mrb[0].mxu0 %v948
  %v1197 = vpop.f32.mrb[0].mxu0
  %v1198 = vadd.f32 %v985, %v1197
  %v1199 = vpop.f32.mrb[0].mxu0
  %v1200 = vpop.f32.mrb[0].mxu0
  %v1201 = vadd.f32 %v985, %v1200
  %v1202 = vpop.f32.mrb[0].mxu0
  %1203 = vmatprep.mubr.bf16.mxu0 0
  %1204 = vmatmul.mubr.bf16.gmra.mrb[0].mxu0 %v949
  %v1205 = vpop.f32.mrb[0].mxu0
  %v1206 = vadd.f32 %v985, %v1205
  %v1207 = vpop.f32.mrb[0].mxu0
  %v1208 = vpop.f32.mrb[0].mxu0
  %v1209 = vadd.f32 %v985, %v1208
  %v1210 = vpop.f32.mrb[0].mxu0
  %1211 = vmatprep.mubr.bf16.mxu0 0
  %1212 = vmatmul.mubr.bf16.gmra.mrb[0].mxu0 %v950
  %v1213 = vpop.f32.mrb[0].mxu0
  %v1214 = vadd.f32 %v985, %v1213
  %v1215 = vpop.f32.mrb[0].mxu0
  %v1216 = vpop.f32.mrb[0].mxu0
  %v1217 = vadd.f32 %v985, %v1216
  %v1218 = vpop.f32.mrb[0].mxu0
  %1219 = vmatprep.mubr.bf16.mxu0 0
  %1220 = vmatmul.mubr.bf16.gmra.mrb[0].mxu0 %v951
  %v1221 = vpop.f32.mrb[0].mxu0
  %v1222 = vadd.f32 %v985, %v1221
  %v1223 = vpop.f32.mrb[0].mxu0
  %v1224 = vpop.f32.mrb[0].mxu0
  %v1225 = vadd.f32 %v985, %v1224
  %v1226 = vpop.f32.mrb[0].mxu0
  %1227 = vmatprep.mubr.bf16.mxu0 0
  %1228 = vmatmul.mubr.bf16.gmra.mrb[0].mxu0 %v952
  %v1229 = vpop.f32.mrb[0].mxu0
  %v1230 = vadd.f32 %v985, %v1229
  %v1231 = vpop.f32.mrb[0].mxu0
  %v1232 = vpop.f32.mrb[0].mxu0
  %v1233 = vadd.f32 %v985, %v1232
  %v1234 = vpop.f32.mrb[0].mxu0
  %1235 = vmatprep.mubr.bf16.mxu0 0
  %1236 = vmatmul.mubr.bf16.gmra.mrb[0].mxu0 %v953
  %v1237 = vpop.f32.mrb[0].mxu0
  %v1238 = vadd.f32 %v985, %v1237
  %v1239 = vpop.f32.mrb[0].mxu0
  %v1240 = vpop.f32.mrb[0].mxu0
  %v1241 = vadd.f32 %v985, %v1240
  %v1242 = vpop.f32.mrb[0].mxu0
  %1243 = vmatprep.mubr.bf16.mxu0 0
  %1244 = vmatmul.mubr.bf16.gmra.mrb[0].mxu0 %v954
  %v1245 = vpop.f32.mrb[0].mxu0
  %v1246 = vadd.f32 %v985, %v1245
  %v1247 = vpop.f32.mrb[0].mxu0
  %v1248 = vpop.f32.mrb[0].mxu0
  %v1249 = vadd.f32 %v985, %v1248
  %v1250 = vpop.f32.mrb[0].mxu0
  %1251 = vmatprep.mubr.bf16.mxu0 0
  %1252 = vmatmul.mubr.bf16.gmra.mrb[0].mxu0 %v955
  %v1253 = vpop.f32.mrb[0].mxu0
  %v1254 = vadd.f32 %v985, %v1253
  %v1255 = vpop.f32.mrb[0].mxu0
  %v1256 = vpop.f32.mrb[0].mxu0
  %v1257 = vadd.f32 %v985, %v1256
  %v1258 = vpop.f32.mrb[0].mxu0
  %1259 = vmatprep.mubr.bf16.mxu0 0
  %1260 = vmatmul.mubr.bf16.gmra.mrb[0].mxu0 %v956
  %v1261 = vpop.f32.mrb[0].mxu0
  %v1262 = vadd.f32 %v985, %v1261
  %v1263 = vpop.f32.mrb[0].mxu0
  %v1264 = vpop.f32.mrb[0].mxu0
  %v1265 = vadd.f32 %v985, %v1264
  %v1266 = vpop.f32.mrb[0].mxu0
  %1267 = vmatprep.mubr.bf16.mxu0 0
  %1268 = vmatmul.mubr.bf16.gmra.mrb[0].mxu0 %v957
  %v1269 = vpop.f32.mrb[0].mxu0
  %v1270 = vadd.f32 %v985, %v1269
  %v1271 = vpop.f32.mrb[0].mxu0
  %v1272 = vpop.f32.mrb[0].mxu0
  %v1273 = vadd.f32 %v985, %v1272
  %v1274 = vpop.f32.mrb[0].mxu0
  %1275 = vmatprep.mubr.bf16.mxu0 0
  %1276 = vmatmul.mubr.bf16.gmra.mrb[0].mxu0 %v958
  %v1277 = vpop.f32.mrb[0].mxu0
  %v1278 = vadd.f32 %v985, %v1277
  %v1279 = vpop.f32.mrb[0].mxu0
  %v1280 = vpop.f32.mrb[0].mxu0
  %v1281 = vadd.f32 %v985, %v1280
  %v1282 = vpop.f32.mrb[0].mxu0
  %1283 = vmatprep.mubr.bf16.mxu0 0
  %1284 = vmatmul.mubr.bf16.gmra.mrb[0].mxu0 %v959
  %v1285 = vpop.f32.mrb[0].mxu0
  %v1286 = vadd.f32 %v985, %v1285
  %v1287 = vpop.f32.mrb[0].mxu0
  %v1288 = vpop.f32.mrb[0].mxu0
  %v1289 = vadd.f32 %v985, %v1288
  %v1290 = vpop.f32.mrb[0].mxu0
  %1291 = vmatprep.mubr.bf16.mxu0 0
  %1292 = vmatmul.mubr.bf16.gmra.mrb[0].mxu0 %v960
  %v1293 = vpop.f32.mrb[0].mxu0
  %v1294 = vadd.f32 %v985, %v1293
  %v1295 = vpop.f32.mrb[0].mxu0
  %v1296 = vpop.f32.mrb[0].mxu0
  %v1297 = vadd.f32 %v985, %v1296
  %v1298 = vpop.f32.mrb[0].mxu0
  %1299 = vmatprep.mubr.bf16.mxu0 0
  %1300 = vmatmul.mubr.bf16.gmra.mrb[0].mxu0 %v961
  %v1301 = vpop.f32.mrb[0].mxu0
  %v1302 = vadd.f32 %v985, %v1301
  %v1303 = vpop.f32.mrb[0].mxu0
  %v1304 = vpop.f32.mrb[0].mxu0
  %v1305 = vadd.f32 %v985, %v1304
  %v1306 = vpop.f32.mrb[0].mxu0
  %1307 = vmatprep.mubr.bf16.mxu0 0
  %1308 = vmatmul.mubr.bf16.gmra.mrb[0].mxu0 %v962
  %v1309 = vpop.f32.mrb[0].mxu0
  %v1310 = vadd.f32 %v985, %v1309
  %v1311 = vpop.f32.mrb[0].mxu0
  %v1312 = vpop.f32.mrb[0].mxu0
  %v1313 = vadd.f32 %v985, %v1312
  %v1314 = vpop.f32.mrb[0].mxu0
  %1315 = vmatprep.mubr.bf16.mxu0 0
  %1316 = vmatmul.mubr.bf16.gmra.mrb[0].mxu0 %v963
  %v1317 = vpop.f32.mrb[0].mxu0
  %v1318 = vadd.f32 %v985, %v1317
  %v1319 = vpop.f32.mrb[0].mxu0
  %v1320 = vpop.f32.mrb[0].mxu0
  %v1321 = vadd.f32 %v985, %v1320
  %v1322 = vpop.f32.mrb[0].mxu0
  %1323 = vdwg.mxu0
  %v1324 = vmul.f32 %v1070, 0.2
  %v1325 = vmul.f32 %v1073, 0.2
  %v1326 = vmul.f32 %v1078, 0.2
  %v1327 = vmul.f32 %v1081, 0.2
  %v1328 = vmul.f32 %v1086, 0.2
  %v1329 = vmul.f32 %v1089, 0.2
  %v1330 = vmul.f32 %v1094, 0.2
  %v1331 = vmul.f32 %v1097, 0.2
  %v1332 = vmul.f32 %v1102, 0.2
  %v1333 = vmul.f32 %v1105, 0.2
  %v1334 = vmul.f32 %v1110, 0.2
  %v1335 = vmul.f32 %v1113, 0.2
  %v1336 = vmul.f32 %v1118, 0.2
  %v1337 = vmul.f32 %v1121, 0.2
  %v1338 = vmul.f32 %v1126, 0.2
  %v1339 = vmul.f32 %v1129, 0.2
  %v1340 = vmul.f32 %v1134, 0.2
  %v1341 = vmul.f32 %v1137, 0.2
  %v1342 = vmul.f32 %v1142, 0.2
  %v1343 = vmul.f32 %v1145, 0.2
  %v1344 = vmul.f32 %v1150, 0.2
  %v1345 = vmul.f32 %v1153, 0.2
  %v1346 = vmul.f32 %v1158, 0.2
  %v1347 = vmul.f32 %v1161, 0.2
  %v1348 = vmul.f32 %v1166, 0.2
  %v1349 = vmul.f32 %v1169, 0.2
  %v1350 = vmul.f32 %v1174, 0.2
  %v1351 = vmul.f32 %v1177, 0.2
  %v1352 = vmul.f32 %v1182, 0.2
  %v1353 = vmul.f32 %v1185, 0.2
  %v1354 = vmul.f32 %v1190, 0.2
  %v1355 = vmul.f32 %v1193, 0.2
  %v1356 = vmul.f32 %v1198, 0.2
  %v1357 = vmul.f32 %v1201, 0.2
  %v1358 = vmul.f32 %v1206, 0.2
  %v1359 = vmul.f32 %v1209, 0.2
  %v1360 = vmul.f32 %v1214, 0.2
  %v1361 = vmul.f32 %v1217, 0.2
  %v1362 = vmul.f32 %v1222, 0.2
  %v1363 = vmul.f32 %v1225, 0.2
  %v1364 = vmul.f32 %v1230, 0.2
  %v1365 = vmul.f32 %v1233, 0.2
  %v1366 = vmul.f32 %v1238, 0.2
  %v1367 = vmul.f32 %v1241, 0.2
  %v1368 = vmul.f32 %v1246, 0.2
  %v1369 = vmul.f32 %v1249, 0.2
  %v1370 = vmul.f32 %v1254, 0.2
  %v1371 = vmul.f32 %v1257, 0.2
  %v1372 = vmul.f32 %v1262, 0.2
  %v1373 = vmul.f32 %v1265, 0.2
  %v1374 = vmul.f32 %v1270, 0.2
  %v1375 = vmul.f32 %v1273, 0.2
  %v1376 = vmul.f32 %v1278, 0.2
  %v1377 = vmul.f32 %v1281, 0.2
  %v1378 = vmul.f32 %v1286, 0.2
  %v1379 = vmul.f32 %v1289, 0.2
  %v1380 = vmul.f32 %v1294, 0.2
  %v1381 = vmul.f32 %v1297, 0.2
  %v1382 = vmul.f32 %v1302, 0.2
  %v1383 = vmul.f32 %v1305, 0.2
  %v1384 = vmul.f32 %v1310, 0.2
  %v1385 = vmul.f32 %v1313, 0.2
  %v1386 = vmul.f32 %v1318, 0.2
  %v1387 = vmul.f32 %v1321, 0.2
  %v1388 = vmax.f32 %v1070, %v1324
  %v1389 = vmax.f32 %v1073, %v1325
  %v1390 = vmax.f32 %v1078, %v1326
  %v1391 = vmax.f32 %v1081, %v1327
  %v1392 = vmax.f32 %v1086, %v1328
  %v1393 = vmax.f32 %v1089, %v1329
  %v1394 = vmax.f32 %v1094, %v1330
  %v1395 = vmax.f32 %v1097, %v1331
  %v1396 = vmax.f32 %v1102, %v1332
  %v1397 = vmax.f32 %v1105, %v1333
  %v1398 = vmax.f32 %v1110, %v1334
  %v1399 = vmax.f32 %v1113, %v1335
  %v1400 = vmax.f32 %v1118, %v1336
  %v1401 = vmax.f32 %v1121, %v1337
  %v1402 = vmax.f32 %v1126, %v1338
  %v1403 = vmax.f32 %v1129, %v1339
  %v1404 = vmax.f32 %v1134, %v1340
  %v1405 = vmax.f32 %v1137, %v1341
  %v1406 = vmax.f32 %v1142, %v1342
  %v1407 = vmax.f32 %v1145, %v1343
  %v1408 = vmax.f32 %v1150, %v1344
  %v1409 = vmax.f32 %v1153, %v1345
  %v1410 = vmax.f32 %v1158, %v1346
  %v1411 = vmax.f32 %v1161, %v1347
  %v1412 = vmax.f32 %v1166, %v1348
  %v1413 = vmax.f32 %v1169, %v1349
  %v1414 = vmax.f32 %v1174, %v1350
  %v1415 = vmax.f32 %v1177, %v1351
  %v1416 = vmax.f32 %v1182, %v1352
  %v1417 = vmax.f32 %v1185, %v1353
  %v1418 = vmax.f32 %v1190, %v1354
  %v1419 = vmax.f32 %v1193, %v1355
  %v1420 = vmax.f32 %v1198, %v1356
  %v1421 = vmax.f32 %v1201, %v1357
  %v1422 = vmax.f32 %v1206, %v1358
  %v1423 = vmax.f32 %v1209, %v1359
  %v1424 = vmax.f32 %v1214, %v1360
  %v1425 = vmax.f32 %v1217, %v1361
  %v1426 = vmax.f32 %v1222, %v1362
  %v1427 = vmax.f32 %v1225, %v1363
  %v1428 = vmax.f32 %v1230, %v1364
  %v1429 = vmax.f32 %v1233, %v1365
  %v1430 = vmax.f32 %v1238, %v1366
  %v1431 = vmax.f32 %v1241, %v1367
  %v1432 = vmax.f32 %v1246, %v1368
  %v1433 = vmax.f32 %v1249, %v1369
  %v1434 = vmax.f32 %v1254, %v1370
  %v1435 = vmax.f32 %v1257, %v1371
  %v1436 = vmax.f32 %v1262, %v1372
  %v1437 = vmax.f32 %v1265, %v1373
  %v1438 = vmax.f32 %v1270, %v1374
  %v1439 = vmax.f32 %v1273, %v1375
  %v1440 = vmax.f32 %v1278, %v1376
  %v1441 = vmax.f32 %v1281, %v1377
  %v1442 = vmax.f32 %v1286, %v1378
  %v1443 = vmax.f32 %v1289, %v1379
  %v1444 = vmax.f32 %v1294, %v1380
  %v1445 = vmax.f32 %v1297, %v1381
  %v1446 = vmax.f32 %v1302, %v1382
  %v1447 = vmax.f32 %v1305, %v1383
  %v1448 = vmax.f32 %v1310, %v1384
  %v1449 = vmax.f32 %v1313, %v1385
  %v1450 = vmax.f32 %v1318, %v1386
  %v1451 = vmax.f32 %v1321, %v1387
  %v1452 = vpack.c.bf16 %v1389, %v1388
  %v1453 = vpack.c.bf16 %v1391, %v1390
  %v1454 = vpack.c.bf16 %v1393, %v1392
  %v1455 = vpack.c.bf16 %v1395, %v1394
  %v1456 = vpack.c.bf16 %v1397, %v1396
  %v1457 = vpack.c.bf16 %v1399, %v1398
  %v1458 = vpack.c.bf16 %v1401, %v1400
  %v1459 = vpack.c.bf16 %v1403, %v1402
  %v1460 = vpack.c.bf16 %v1405, %v1404
  %v1461 = vpack.c.bf16 %v1407, %v1406
  %v1462 = vpack.c.bf16 %v1409, %v1408
  %v1463 = vpack.c.bf16 %v1411, %v1410
  %v1464 = vpack.c.bf16 %v1413, %v1412
  %v1465 = vpack.c.bf16 %v1415, %v1414
  %v1466 = vpack.c.bf16 %v1417, %v1416
  %v1467 = vpack.c.bf16 %v1419, %v1418
  %v1468 = vpack.c.bf16 %v1421, %v1420
  %v1469 = vpack.c.bf16 %v1423, %v1422
  %v1470 = vpack.c.bf16 %v1425, %v1424
  %v1471 = vpack.c.bf16 %v1427, %v1426
  %v1472 = vpack.c.bf16 %v1429, %v1428
  %v1473 = vpack.c.bf16 %v1431, %v1430
  %v1474 = vpack.c.bf16 %v1433, %v1432
  %v1475 = vpack.c.bf16 %v1435, %v1434
  %v1476 = vpack.c.bf16 %v1437, %v1436
  %v1477 = vpack.c.bf16 %v1439, %v1438
  %v1478 = vpack.c.bf16 %v1441, %v1440
  %v1479 = vpack.c.bf16 %v1443, %v1442
  %v1480 = vpack.c.bf16 %v1445, %v1444
  %v1481 = vpack.c.bf16 %v1447, %v1446
  %v1482 = vpack.c.bf16 %v1449, %v1448
  %v1483 = vpack.c.bf16 %v1451, %v1450
  %v1484 = vld [vmem:[%s5] sm:$0xf]
  %v1485 = vld [vmem:[%s5 + $0x4] sm:$0xf]
  %v1486 = vld [vmem:[%s5 + $0x8] sm:$0xf]
  %v1487 = vld [vmem:[%s5 + $0xc] sm:$0xf]
  %v1488 = vld [vmem:[%s5 + $0x10] sm:$0xf]
  %v1489 = vld [vmem:[%s5 + $0x14] sm:$0xf]
  %v1490 = vld [vmem:[%s5 + $0x18] sm:$0xf]
  %v1491 = vld [vmem:[%s5 + $0x1c] sm:$0xf]
  %v1492 = vld [vmem:[%s5 + $0x20] sm:$0xf]
  %v1493 = vld [vmem:[%s5 + $0x24] sm:$0xf]
  %v1494 = vld [vmem:[%s5 + $0x28] sm:$0xf]
  %v1495 = vld [vmem:[%s5 + $0x2c] sm:$0xf]
  %v1496 = vld [vmem:[%s5 + $0x30] sm:$0xf]
  %v1497 = vld [vmem:[%s5 + $0x34] sm:$0xf]
  %v1498 = vld [vmem:[%s5 + $0x38] sm:$0xf]
  %v1499 = vld [vmem:[%s5 + $0x3c] sm:$0xf]
  %v1500 = vld [vmem:[%s6] sm:$0x1]
  %v1502 = vlaneseq
  %v1503 = vshrl.u32 %v1502, 7
  %v1504 = vsub.s32 0, %v1503
  %v1505 = vrot.slane %v1500, %v1504
  %v1523 = vunpack.c.l.b16 %v1484
  %v1524 = vunpack.c.l.b16 %v1485
  %v1525 = vunpack.c.l.b16 %v1486
  %v1526 = vunpack.c.l.b16 %v1487
  %v1527 = vunpack.c.l.b16 %v1488
  %v1528 = vunpack.c.l.b16 %v1489
  %v1529 = vunpack.c.l.b16 %v1490
  %v1530 = vunpack.c.l.b16 %v1491
  %v1531 = vunpack.c.l.b16 %v1492
  %v1532 = vunpack.c.l.b16 %v1493
  %v1533 = vunpack.c.l.b16 %v1494
  %v1534 = vunpack.c.l.b16 %v1495
  %v1535 = vunpack.c.l.b16 %v1496
  %v1536 = vunpack.c.l.b16 %v1497
  %v1537 = vunpack.c.l.b16 %v1498
  %v1538 = vunpack.c.l.b16 %v1499
  %v1539 = vpack.c.b16 %v1524, %v1523
  %v1540 = vpack.c.b16 %v1526, %v1525
  %v1541 = vpack.c.b16 %v1528, %v1527
  %v1542 = vpack.c.b16 %v1530, %v1529
  %v1543 = vpack.c.b16 %v1532, %v1531
  %v1544 = vpack.c.b16 %v1534, %v1533
  %v1545 = vpack.c.b16 %v1536, %v1535
  %v1546 = vpack.c.b16 %v1538, %v1537
  %1555 = vmatprep.subr.bf16.mxu0 0
  %1556 = vmatpush1.bf16.msra.mxu0 %v1539
  %1557 = vmatprep.subr.bf16.mxu0 0
  %1558 = vmatpush1.bf16.msra.mxu0 %v1540
  %1559 = vmatprep.subr.bf16.mxu0 0
  %1560 = vmatpush1.bf16.msra.mxu0 %v1541
  %1561 = vmatprep.subr.bf16.mxu0 0
  %1562 = vmatpush1.bf16.msra.mxu0 %v1542
  %1563 = vmatprep.subr.bf16.mxu0 0
  %1564 = vmatpush1.bf16.msra.mxu0 %v1543
  %1565 = vmatprep.subr.bf16.mxu0 0
  %1566 = vmatpush1.bf16.msra.mxu0 %v1544
  %1567 = vmatprep.subr.bf16.mxu0 0
  %1568 = vmatpush1.bf16.msra.mxu0 %v1545
  %1569 = vmatprep.subr.bf16.mxu0 0
  %1570 = vmatpush1.bf16.msra.mxu0 %v1546
  %1571 = vmatprep.subr.bf16.mxu0 0
  %1572 = vmatpush1.bf16.msra.mxu0 0
  %1573 = vmatprep.subr.bf16.mxu0 0
  %1574 = vmatpush1.bf16.msra.mxu0 0
  %1575 = vmatprep.subr.bf16.mxu0 0
  %1576 = vmatpush1.bf16.msra.mxu0 0
  %1577 = vmatprep.subr.bf16.mxu0 0
  %1578 = vmatpush1.bf16.msra.mxu0 0
  %1579 = vmatprep.subr.bf16.mxu0 0
  %1580 = vmatpush1.bf16.msra.mxu0 0
  %1581 = vmatprep.subr.bf16.mxu0 0
  %1582 = vmatpush1.bf16.msra.mxu0 0
  %1583 = vmatprep.subr.bf16.mxu0 0
  %1584 = vmatpush1.bf16.msra.mxu0 0
  %1585 = vmatprep.subr.bf16.mxu0 0
  %1586 = vmatpush1.bf16.msra.mxu0 0
  %1587 = vmatprep.mubr.bf16.mxu0 0
  %1588 = vmatmul.mubr.bf16.gmra.mrb[0].mxu0 %v1452
  %v1589 = vpop.f32.mrb[0].mxu0
  %v1590 = vadd.f32 %v1505, %v1589
  %v1591 = vpop.f32.mrb[0].mxu0
  %v1592 = vpop.f32.mrb[0].mxu0
  %v1593 = vadd.f32 %v1505, %v1592
  %v1594 = vpop.f32.mrb[0].mxu0
  %1595 = vmatprep.mubr.bf16.mxu0 0
  %1596 = vmatmul.mubr.bf16.gmra.mrb[0].mxu0 %v1453
  %v1597 = vpop.f32.mrb[0].mxu0
  %v1598 = vadd.f32 %v1505, %v1597
  %v1599 = vpop.f32.mrb[0].mxu0
  %v1600 = vpop.f32.mrb[0].mxu0
  %v1601 = vadd.f32 %v1505, %v1600
  %v1602 = vpop.f32.mrb[0].mxu0
  %1603 = vmatprep.mubr.bf16.mxu0 0
  %1604 = vmatmul.mubr.bf16.gmra.mrb[0].mxu0 %v1454
  %v1605 = vpop.f32.mrb[0].mxu0
  %v1606 = vadd.f32 %v1505, %v1605
  %v1607 = vpop.f32.mrb[0].mxu0
  %v1608 = vpop.f32.mrb[0].mxu0
  %v1609 = vadd.f32 %v1505, %v1608
  %v1610 = vpop.f32.mrb[0].mxu0
  %1611 = vmatprep.mubr.bf16.mxu0 0
  %1612 = vmatmul.mubr.bf16.gmra.mrb[0].mxu0 %v1455
  %v1613 = vpop.f32.mrb[0].mxu0
  %v1614 = vadd.f32 %v1505, %v1613
  %v1615 = vpop.f32.mrb[0].mxu0
  %v1616 = vpop.f32.mrb[0].mxu0
  %v1617 = vadd.f32 %v1505, %v1616
  %v1618 = vpop.f32.mrb[0].mxu0
  %1619 = vmatprep.mubr.bf16.mxu0 0
  %1620 = vmatmul.mubr.bf16.gmra.mrb[0].mxu0 %v1456
  %v1621 = vpop.f32.mrb[0].mxu0
  %v1622 = vadd.f32 %v1505, %v1621
  %v1623 = vpop.f32.mrb[0].mxu0
  %v1624 = vpop.f32.mrb[0].mxu0
  %v1625 = vadd.f32 %v1505, %v1624
  %v1626 = vpop.f32.mrb[0].mxu0
  %1627 = vmatprep.mubr.bf16.mxu0 0
  %1628 = vmatmul.mubr.bf16.gmra.mrb[0].mxu0 %v1457
  %v1629 = vpop.f32.mrb[0].mxu0
  %v1630 = vadd.f32 %v1505, %v1629
  %v1631 = vpop.f32.mrb[0].mxu0
  %v1632 = vpop.f32.mrb[0].mxu0
  %v1633 = vadd.f32 %v1505, %v1632
  %v1634 = vpop.f32.mrb[0].mxu0
  %1635 = vmatprep.mubr.bf16.mxu0 0
  %1636 = vmatmul.mubr.bf16.gmra.mrb[0].mxu0 %v1458
  %v1637 = vpop.f32.mrb[0].mxu0
  %v1638 = vadd.f32 %v1505, %v1637
  %v1639 = vpop.f32.mrb[0].mxu0
  %v1640 = vpop.f32.mrb[0].mxu0
  %v1641 = vadd.f32 %v1505, %v1640
  %v1642 = vpop.f32.mrb[0].mxu0
  %1643 = vmatprep.mubr.bf16.mxu0 0
  %1644 = vmatmul.mubr.bf16.gmra.mrb[0].mxu0 %v1459
  %v1645 = vpop.f32.mrb[0].mxu0
  %v1646 = vadd.f32 %v1505, %v1645
  %v1647 = vpop.f32.mrb[0].mxu0
  %v1648 = vpop.f32.mrb[0].mxu0
  %v1649 = vadd.f32 %v1505, %v1648
  %v1650 = vpop.f32.mrb[0].mxu0
  %1651 = vmatprep.mubr.bf16.mxu0 0
  %1652 = vmatmul.mubr.bf16.gmra.mrb[0].mxu0 %v1460
  %v1653 = vpop.f32.mrb[0].mxu0
  %v1654 = vadd.f32 %v1505, %v1653
  %v1655 = vpop.f32.mrb[0].mxu0
  %v1656 = vpop.f32.mrb[0].mxu0
  %v1657 = vadd.f32 %v1505, %v1656
  %v1658 = vpop.f32.mrb[0].mxu0
  %1659 = vmatprep.mubr.bf16.mxu0 0
  %1660 = vmatmul.mubr.bf16.gmra.mrb[0].mxu0 %v1461
  %v1661 = vpop.f32.mrb[0].mxu0
  %v1662 = vadd.f32 %v1505, %v1661
  %v1663 = vpop.f32.mrb[0].mxu0
  %v1664 = vpop.f32.mrb[0].mxu0
  %v1665 = vadd.f32 %v1505, %v1664
  %v1666 = vpop.f32.mrb[0].mxu0
  %1667 = vmatprep.mubr.bf16.mxu0 0
  %1668 = vmatmul.mubr.bf16.gmra.mrb[0].mxu0 %v1462
  %v1669 = vpop.f32.mrb[0].mxu0
  %v1670 = vadd.f32 %v1505, %v1669
  %v1671 = vpop.f32.mrb[0].mxu0
  %v1672 = vpop.f32.mrb[0].mxu0
  %v1673 = vadd.f32 %v1505, %v1672
  %v1674 = vpop.f32.mrb[0].mxu0
  %1675 = vmatprep.mubr.bf16.mxu0 0
  %1676 = vmatmul.mubr.bf16.gmra.mrb[0].mxu0 %v1463
  %v1677 = vpop.f32.mrb[0].mxu0
  %v1678 = vadd.f32 %v1505, %v1677
  %v1679 = vpop.f32.mrb[0].mxu0
  %v1680 = vpop.f32.mrb[0].mxu0
  %v1681 = vadd.f32 %v1505, %v1680
  %v1682 = vpop.f32.mrb[0].mxu0
  %1683 = vmatprep.mubr.bf16.mxu0 0
  %1684 = vmatmul.mubr.bf16.gmra.mrb[0].mxu0 %v1464
  %v1685 = vpop.f32.mrb[0].mxu0
  %v1686 = vadd.f32 %v1505, %v1685
  %v1687 = vpop.f32.mrb[0].mxu0
  %v1688 = vpop.f32.mrb[0].mxu0
  %v1689 = vadd.f32 %v1505, %v1688
  %v1690 = vpop.f32.mrb[0].mxu0
  %1691 = vmatprep.mubr.bf16.mxu0 0
  %1692 = vmatmul.mubr.bf16.gmra.mrb[0].mxu0 %v1465
  %v1693 = vpop.f32.mrb[0].mxu0
  %v1694 = vadd.f32 %v1505, %v1693
  %v1695 = vpop.f32.mrb[0].mxu0
  %v1696 = vpop.f32.mrb[0].mxu0
  %v1697 = vadd.f32 %v1505, %v1696
  %v1698 = vpop.f32.mrb[0].mxu0
  %1699 = vmatprep.mubr.bf16.mxu0 0
  %1700 = vmatmul.mubr.bf16.gmra.mrb[0].mxu0 %v1466
  %v1701 = vpop.f32.mrb[0].mxu0
  %v1702 = vadd.f32 %v1505, %v1701
  %v1703 = vpop.f32.mrb[0].mxu0
  %v1704 = vpop.f32.mrb[0].mxu0
  %v1705 = vadd.f32 %v1505, %v1704
  %v1706 = vpop.f32.mrb[0].mxu0
  %1707 = vmatprep.mubr.bf16.mxu0 0
  %1708 = vmatmul.mubr.bf16.gmra.mrb[0].mxu0 %v1467
  %v1709 = vpop.f32.mrb[0].mxu0
  %v1710 = vadd.f32 %v1505, %v1709
  %v1711 = vpop.f32.mrb[0].mxu0
  %v1712 = vpop.f32.mrb[0].mxu0
  %v1713 = vadd.f32 %v1505, %v1712
  %v1714 = vpop.f32.mrb[0].mxu0
  %1715 = vmatprep.mubr.bf16.mxu0 0
  %1716 = vmatmul.mubr.bf16.gmra.mrb[0].mxu0 %v1468
  %v1717 = vpop.f32.mrb[0].mxu0
  %v1718 = vadd.f32 %v1505, %v1717
  %v1719 = vpop.f32.mrb[0].mxu0
  %v1720 = vpop.f32.mrb[0].mxu0
  %v1721 = vadd.f32 %v1505, %v1720
  %v1722 = vpop.f32.mrb[0].mxu0
  %1723 = vmatprep.mubr.bf16.mxu0 0
  %1724 = vmatmul.mubr.bf16.gmra.mrb[0].mxu0 %v1469
  %v1725 = vpop.f32.mrb[0].mxu0
  %v1726 = vadd.f32 %v1505, %v1725
  %v1727 = vpop.f32.mrb[0].mxu0
  %v1728 = vpop.f32.mrb[0].mxu0
  %v1729 = vadd.f32 %v1505, %v1728
  %v1730 = vpop.f32.mrb[0].mxu0
  %1731 = vmatprep.mubr.bf16.mxu0 0
  %1732 = vmatmul.mubr.bf16.gmra.mrb[0].mxu0 %v1470
  %v1733 = vpop.f32.mrb[0].mxu0
  %v1734 = vadd.f32 %v1505, %v1733
  %v1735 = vpop.f32.mrb[0].mxu0
  %v1736 = vpop.f32.mrb[0].mxu0
  %v1737 = vadd.f32 %v1505, %v1736
  %v1738 = vpop.f32.mrb[0].mxu0
  %1739 = vmatprep.mubr.bf16.mxu0 0
  %1740 = vmatmul.mubr.bf16.gmra.mrb[0].mxu0 %v1471
  %v1741 = vpop.f32.mrb[0].mxu0
  %v1742 = vadd.f32 %v1505, %v1741
  %v1743 = vpop.f32.mrb[0].mxu0
  %v1744 = vpop.f32.mrb[0].mxu0
  %v1745 = vadd.f32 %v1505, %v1744
  %v1746 = vpop.f32.mrb[0].mxu0
  %1747 = vmatprep.mubr.bf16.mxu0 0
  %1748 = vmatmul.mubr.bf16.gmra.mrb[0].mxu0 %v1472
  %v1749 = vpop.f32.mrb[0].mxu0
  %v1750 = vadd.f32 %v1505, %v1749
  %v1751 = vpop.f32.mrb[0].mxu0
  %v1752 = vpop.f32.mrb[0].mxu0
  %v1753 = vadd.f32 %v1505, %v1752
  %v1754 = vpop.f32.mrb[0].mxu0
  %1755 = vmatprep.mubr.bf16.mxu0 0
  %1756 = vmatmul.mubr.bf16.gmra.mrb[0].mxu0 %v1473
  %v1757 = vpop.f32.mrb[0].mxu0
  %v1758 = vadd.f32 %v1505, %v1757
  %v1759 = vpop.f32.mrb[0].mxu0
  %v1760 = vpop.f32.mrb[0].mxu0
  %v1761 = vadd.f32 %v1505, %v1760
  %v1762 = vpop.f32.mrb[0].mxu0
  %1763 = vmatprep.mubr.bf16.mxu0 0
  %1764 = vmatmul.mubr.bf16.gmra.mrb[0].mxu0 %v1474
  %v1765 = vpop.f32.mrb[0].mxu0
  %v1766 = vadd.f32 %v1505, %v1765
  %v1767 = vpop.f32.mrb[0].mxu0
  %v1768 = vpop.f32.mrb[0].mxu0
  %v1769 = vadd.f32 %v1505, %v1768
  %v1770 = vpop.f32.mrb[0].mxu0
  %1771 = vmatprep.mubr.bf16.mxu0 0
  %1772 = vmatmul.mubr.bf16.gmra.mrb[0].mxu0 %v1475
  %v1773 = vpop.f32.mrb[0].mxu0
  %v1774 = vadd.f32 %v1505, %v1773
  %v1775 = vpop.f32.mrb[0].mxu0
  %v1776 = vpop.f32.mrb[0].mxu0
  %v1777 = vadd.f32 %v1505, %v1776
  %v1778 = vpop.f32.mrb[0].mxu0
  %1779 = vmatprep.mubr.bf16.mxu0 0
  %1780 = vmatmul.mubr.bf16.gmra.mrb[0].mxu0 %v1476
  %v1781 = vpop.f32.mrb[0].mxu0
  %v1782 = vadd.f32 %v1505, %v1781
  %v1783 = vpop.f32.mrb[0].mxu0
  %v1784 = vpop.f32.mrb[0].mxu0
  %v1785 = vadd.f32 %v1505, %v1784
  %v1786 = vpop.f32.mrb[0].mxu0
  %1787 = vmatprep.mubr.bf16.mxu0 0
  %1788 = vmatmul.mubr.bf16.gmra.mrb[0].mxu0 %v1477
  %v1789 = vpop.f32.mrb[0].mxu0
  %v1790 = vadd.f32 %v1505, %v1789
  %v1791 = vpop.f32.mrb[0].mxu0
  %v1792 = vpop.f32.mrb[0].mxu0
  %v1793 = vadd.f32 %v1505, %v1792
  %v1794 = vpop.f32.mrb[0].mxu0
  %1795 = vmatprep.mubr.bf16.mxu0 0
  %1796 = vmatmul.mubr.bf16.gmra.mrb[0].mxu0 %v1478
  %v1797 = vpop.f32.mrb[0].mxu0
  %v1798 = vadd.f32 %v1505, %v1797
  %v1799 = vpop.f32.mrb[0].mxu0
  %v1800 = vpop.f32.mrb[0].mxu0
  %v1801 = vadd.f32 %v1505, %v1800
  %v1802 = vpop.f32.mrb[0].mxu0
  %1803 = vmatprep.mubr.bf16.mxu0 0
  %1804 = vmatmul.mubr.bf16.gmra.mrb[0].mxu0 %v1479
  %v1805 = vpop.f32.mrb[0].mxu0
  %v1806 = vadd.f32 %v1505, %v1805
  %v1807 = vpop.f32.mrb[0].mxu0
  %v1808 = vpop.f32.mrb[0].mxu0
  %v1809 = vadd.f32 %v1505, %v1808
  %v1810 = vpop.f32.mrb[0].mxu0
  %1811 = vmatprep.mubr.bf16.mxu0 0
  %1812 = vmatmul.mubr.bf16.gmra.mrb[0].mxu0 %v1480
  %v1813 = vpop.f32.mrb[0].mxu0
  %v1814 = vadd.f32 %v1505, %v1813
  %v1815 = vpop.f32.mrb[0].mxu0
  %v1816 = vpop.f32.mrb[0].mxu0
  %v1817 = vadd.f32 %v1505, %v1816
  %v1818 = vpop.f32.mrb[0].mxu0
  %1819 = vmatprep.mubr.bf16.mxu0 0
  %1820 = vmatmul.mubr.bf16.gmra.mrb[0].mxu0 %v1481
  %v1821 = vpop.f32.mrb[0].mxu0
  %v1822 = vadd.f32 %v1505, %v1821
  %v1823 = vpop.f32.mrb[0].mxu0
  %v1824 = vpop.f32.mrb[0].mxu0
  %v1825 = vadd.f32 %v1505, %v1824
  %v1826 = vpop.f32.mrb[0].mxu0
  %1827 = vmatprep.mubr.bf16.mxu0 0
  %1828 = vmatmul.mubr.bf16.gmra.mrb[0].mxu0 %v1482
  %v1829 = vpop.f32.mrb[0].mxu0
  %v1830 = vadd.f32 %v1505, %v1829
  %v1831 = vpop.f32.mrb[0].mxu0
  %v1832 = vpop.f32.mrb[0].mxu0
  %v1833 = vadd.f32 %v1505, %v1832
  %v1834 = vpop.f32.mrb[0].mxu0
  %1835 = vmatprep.mubr.bf16.mxu0 0
  %1836 = vmatmul.mubr.bf16.gmra.mrb[0].mxu0 %v1483
  %v1837 = vpop.f32.mrb[0].mxu0
  %v1838 = vadd.f32 %v1505, %v1837
  %v1839 = vpop.f32.mrb[0].mxu0
  %v1840 = vpop.f32.mrb[0].mxu0
  %v1841 = vadd.f32 %v1505, %v1840
  %v1842 = vpop.f32.mrb[0].mxu0
  %1843 = vdwg.mxu0
  %v1844 = vsel %vm91, 1, 0
  %v1845 = vsel %vm92, 1, 0
  %v1846 = vsel %vm93, 1, 0
  %v1847 = vsel %vm94, 1, 0
  %v1848 = vsel %vm95, 1, 0
  %v1849 = vsel %vm96, 1, 0
  %v1850 = vsel %vm97, 1, 0
  %v1851 = vsel %vm98, 1, 0
  %v1852 = vsel %vm99, 1, 0
  %v1853 = vsel %vm100, 1, 0
  %v1854 = vsel %vm101, 1, 0
  %v1855 = vsel %vm102, 1, 0
  %v1856 = vsel %vm103, 1, 0
  %v1857 = vsel %vm104, 1, 0
  %v1858 = vsel %vm105, 1, 0
  %v1859 = vsel %vm106, 1, 0
  %v1860 = vsel %vm107, 1, 0
  %v1861 = vsel %vm108, 1, 0
  %v1862 = vsel %vm109, 1, 0
  %v1863 = vsel %vm110, 1, 0
  %v1864 = vsel %vm111, 1, 0
  %v1865 = vsel %vm112, 1, 0
  %v1866 = vsel %vm113, 1, 0
  %v1867 = vsel %vm114, 1, 0
  %v1868 = vsel %vm115, 1, 0
  %v1869 = vsel %vm116, 1, 0
  %v1870 = vsel %vm117, 1, 0
  %v1871 = vsel %vm118, 1, 0
  %v1872 = vsel %vm119, 1, 0
  %v1873 = vsel %vm120, 1, 0
  %v1874 = vsel %vm121, 1, 0
  %v1875 = vsel %vm122, 1, 0
  %v1876 = vsel %vm123, 1, 0
  %v1877 = vsel %vm124, 1, 0
  %v1878 = vsel %vm125, 1, 0
  %v1879 = vsel %vm126, 1, 0
  %v1880 = vsel %vm127, 1, 0
  %v1881 = vsel %vm128, 1, 0
  %v1882 = vsel %vm129, 1, 0
  %v1883 = vsel %vm130, 1, 0
  %v1884 = vsel %vm131, 1, 0
  %v1885 = vsel %vm132, 1, 0
  %v1886 = vsel %vm133, 1, 0
  %v1887 = vsel %vm134, 1, 0
  %v1888 = vsel %vm135, 1, 0
  %v1889 = vsel %vm136, 1, 0
  %v1890 = vsel %vm137, 1, 0
  %v1891 = vsel %vm138, 1, 0
  %v1892 = vsel %vm139, 1, 0
  %v1893 = vsel %vm140, 1, 0
  %v1894 = vsel %vm141, 1, 0
  %v1895 = vsel %vm142, 1, 0
  %v1896 = vsel %vm143, 1, 0
  %v1897 = vsel %vm144, 1, 0
  %v1898 = vsel %vm145, 1, 0
  %v1899 = vsel %vm146, 1, 0
  %v1900 = vsel %vm147, 1, 0
  %v1901 = vsel %vm148, 1, 0
  %v1902 = vsel %vm149, 1, 0
  %v1903 = vsel %vm150, 1, 0
  %v1904 = vsel %vm151, 1, 0
  %v1905 = vsel %vm152, 1, 0
  %v1906 = vsel %vm153, 1, 0
  %v1907 = vsel %vm154, 1, 0
  %1908 = vset.pattern.permute.xlu0 0
  %1909 = vperm.xlu0 %1908, %v1844
  %v1910 = vpop.permute.xlu0 %1909
  %1911 = vset.pattern.permute.xlu0 0
  %1912 = vperm.xlu0 %1911, %v1845
  %v1913 = vpop.permute.xlu0 %1912
  %1914 = vset.pattern.permute.xlu0 0
  %1915 = vperm.xlu0 %1914, %v1846
  %v1916 = vpop.permute.xlu0 %1915
  %1917 = vset.pattern.permute.xlu0 0
  %1918 = vperm.xlu0 %1917, %v1847
  %v1919 = vpop.permute.xlu0 %1918
  %1920 = vset.pattern.permute.xlu0 0
  %1921 = vperm.xlu0 %1920, %v1848
  %v1922 = vpop.permute.xlu0 %1921
  %1923 = vset.pattern.permute.xlu0 0
  %1924 = vperm.xlu0 %1923, %v1849
  %v1925 = vpop.permute.xlu0 %1924
  %1926 = vset.pattern.permute.xlu0 0
  %1927 = vperm.xlu0 %1926, %v1850
  %v1928 = vpop.permute.xlu0 %1927
  %1929 = vset.pattern.permute.xlu0 0
  %1930 = vperm.xlu0 %1929, %v1851
  %v1931 = vpop.permute.xlu0 %1930
  %1932 = vset.pattern.permute.xlu0 0
  %1933 = vperm.xlu0 %1932, %v1852
  %v1934 = vpop.permute.xlu0 %1933
  %1935 = vset.pattern.permute.xlu0 0
  %1936 = vperm.xlu0 %1935, %v1853
  %v1937 = vpop.permute.xlu0 %1936
  %1938 = vset.pattern.permute.xlu0 0
  %1939 = vperm.xlu0 %1938, %v1854
  %v1940 = vpop.permute.xlu0 %1939
  %1941 = vset.pattern.permute.xlu0 0
  %1942 = vperm.xlu0 %1941, %v1855
  %v1943 = vpop.permute.xlu0 %1942
  %1944 = vset.pattern.permute.xlu0 0
  %1945 = vperm.xlu0 %1944, %v1856
  %v1946 = vpop.permute.xlu0 %1945
  %1947 = vset.pattern.permute.xlu0 0
  %1948 = vperm.xlu0 %1947, %v1857
  %v1949 = vpop.permute.xlu0 %1948
  %1950 = vset.pattern.permute.xlu0 0
  %1951 = vperm.xlu0 %1950, %v1858
  %v1952 = vpop.permute.xlu0 %1951
  %1953 = vset.pattern.permute.xlu0 0
  %1954 = vperm.xlu0 %1953, %v1859
  %v1955 = vpop.permute.xlu0 %1954
  %1956 = vset.pattern.permute.xlu0 0
  %1957 = vperm.xlu0 %1956, %v1860
  %v1958 = vpop.permute.xlu0 %1957
  %1959 = vset.pattern.permute.xlu0 0
  %1960 = vperm.xlu0 %1959, %v1861
  %v1961 = vpop.permute.xlu0 %1960
  %1962 = vset.pattern.permute.xlu0 0
  %1963 = vperm.xlu0 %1962, %v1862
  %v1964 = vpop.permute.xlu0 %1963
  %1965 = vset.pattern.permute.xlu0 0
  %1966 = vperm.xlu0 %1965, %v1863
  %v1967 = vpop.permute.xlu0 %1966
  %1968 = vset.pattern.permute.xlu0 0
  %1969 = vperm.xlu0 %1968, %v1864
  %v1970 = vpop.permute.xlu0 %1969
  %1971 = vset.pattern.permute.xlu0 0
  %1972 = vperm.xlu0 %1971, %v1865
  %v1973 = vpop.permute.xlu0 %1972
  %1974 = vset.pattern.permute.xlu0 0
  %1975 = vperm.xlu0 %1974, %v1866
  %v1976 = vpop.permute.xlu0 %1975
  %1977 = vset.pattern.permute.xlu0 0
  %1978 = vperm.xlu0 %1977, %v1867
  %v1979 = vpop.permute.xlu0 %1978
  %1980 = vset.pattern.permute.xlu0 0
  %1981 = vperm.xlu0 %1980, %v1868
  %v1982 = vpop.permute.xlu0 %1981
  %1983 = vset.pattern.permute.xlu0 0
  %1984 = vperm.xlu0 %1983, %v1869
  %v1985 = vpop.permute.xlu0 %1984
  %1986 = vset.pattern.permute.xlu0 0
  %1987 = vperm.xlu0 %1986, %v1870
  %v1988 = vpop.permute.xlu0 %1987
  %1989 = vset.pattern.permute.xlu0 0
  %1990 = vperm.xlu0 %1989, %v1871
  %v1991 = vpop.permute.xlu0 %1990
  %1992 = vset.pattern.permute.xlu0 0
  %1993 = vperm.xlu0 %1992, %v1872
  %v1994 = vpop.permute.xlu0 %1993
  %1995 = vset.pattern.permute.xlu0 0
  %1996 = vperm.xlu0 %1995, %v1873
  %v1997 = vpop.permute.xlu0 %1996
  %1998 = vset.pattern.permute.xlu0 0
  %1999 = vperm.xlu0 %1998, %v1874
  %v2000 = vpop.permute.xlu0 %1999
  %2001 = vset.pattern.permute.xlu0 0
  %2002 = vperm.xlu0 %2001, %v1875
  %v2003 = vpop.permute.xlu0 %2002
  %2004 = vset.pattern.permute.xlu0 0
  %2005 = vperm.xlu0 %2004, %v1876
  %v2006 = vpop.permute.xlu0 %2005
  %2007 = vset.pattern.permute.xlu0 0
  %2008 = vperm.xlu0 %2007, %v1877
  %v2009 = vpop.permute.xlu0 %2008
  %2010 = vset.pattern.permute.xlu0 0
  %2011 = vperm.xlu0 %2010, %v1878
  %v2012 = vpop.permute.xlu0 %2011
  %2013 = vset.pattern.permute.xlu0 0
  %2014 = vperm.xlu0 %2013, %v1879
  %v2015 = vpop.permute.xlu0 %2014
  %2016 = vset.pattern.permute.xlu0 0
  %2017 = vperm.xlu0 %2016, %v1880
  %v2018 = vpop.permute.xlu0 %2017
  %2019 = vset.pattern.permute.xlu0 0
  %2020 = vperm.xlu0 %2019, %v1881
  %v2021 = vpop.permute.xlu0 %2020
  %2022 = vset.pattern.permute.xlu0 0
  %2023 = vperm.xlu0 %2022, %v1882
  %v2024 = vpop.permute.xlu0 %2023
  %2025 = vset.pattern.permute.xlu0 0
  %2026 = vperm.xlu0 %2025, %v1883
  %v2027 = vpop.permute.xlu0 %2026
  %2028 = vset.pattern.permute.xlu0 0
  %2029 = vperm.xlu0 %2028, %v1884
  %v2030 = vpop.permute.xlu0 %2029
  %2031 = vset.pattern.permute.xlu0 0
  %2032 = vperm.xlu0 %2031, %v1885
  %v2033 = vpop.permute.xlu0 %2032
  %2034 = vset.pattern.permute.xlu0 0
  %2035 = vperm.xlu0 %2034, %v1886
  %v2036 = vpop.permute.xlu0 %2035
  %2037 = vset.pattern.permute.xlu0 0
  %2038 = vperm.xlu0 %2037, %v1887
  %v2039 = vpop.permute.xlu0 %2038
  %2040 = vset.pattern.permute.xlu0 0
  %2041 = vperm.xlu0 %2040, %v1888
  %v2042 = vpop.permute.xlu0 %2041
  %2043 = vset.pattern.permute.xlu0 0
  %2044 = vperm.xlu0 %2043, %v1889
  %v2045 = vpop.permute.xlu0 %2044
  %2046 = vset.pattern.permute.xlu0 0
  %2047 = vperm.xlu0 %2046, %v1890
  %v2048 = vpop.permute.xlu0 %2047
  %2049 = vset.pattern.permute.xlu0 0
  %2050 = vperm.xlu0 %2049, %v1891
  %v2051 = vpop.permute.xlu0 %2050
  %2052 = vset.pattern.permute.xlu0 0
  %2053 = vperm.xlu0 %2052, %v1892
  %v2054 = vpop.permute.xlu0 %2053
  %2055 = vset.pattern.permute.xlu0 0
  %2056 = vperm.xlu0 %2055, %v1893
  %v2057 = vpop.permute.xlu0 %2056
  %2058 = vset.pattern.permute.xlu0 0
  %2059 = vperm.xlu0 %2058, %v1894
  %v2060 = vpop.permute.xlu0 %2059
  %2061 = vset.pattern.permute.xlu0 0
  %2062 = vperm.xlu0 %2061, %v1895
  %v2063 = vpop.permute.xlu0 %2062
  %2064 = vset.pattern.permute.xlu0 0
  %2065 = vperm.xlu0 %2064, %v1896
  %v2066 = vpop.permute.xlu0 %2065
  %2067 = vset.pattern.permute.xlu0 0
  %2068 = vperm.xlu0 %2067, %v1897
  %v2069 = vpop.permute.xlu0 %2068
  %2070 = vset.pattern.permute.xlu0 0
  %2071 = vperm.xlu0 %2070, %v1898
  %v2072 = vpop.permute.xlu0 %2071
  %2073 = vset.pattern.permute.xlu0 0
  %2074 = vperm.xlu0 %2073, %v1899
  %v2075 = vpop.permute.xlu0 %2074
  %2076 = vset.pattern.permute.xlu0 0
  %2077 = vperm.xlu0 %2076, %v1900
  %v2078 = vpop.permute.xlu0 %2077
  %2079 = vset.pattern.permute.xlu0 0
  %2080 = vperm.xlu0 %2079, %v1901
  %v2081 = vpop.permute.xlu0 %2080
  %2082 = vset.pattern.permute.xlu0 0
  %2083 = vperm.xlu0 %2082, %v1902
  %v2084 = vpop.permute.xlu0 %2083
  %2085 = vset.pattern.permute.xlu0 0
  %2086 = vperm.xlu0 %2085, %v1903
  %v2087 = vpop.permute.xlu0 %2086
  %2088 = vset.pattern.permute.xlu0 0
  %2089 = vperm.xlu0 %2088, %v1904
  %v2090 = vpop.permute.xlu0 %2089
  %2091 = vset.pattern.permute.xlu0 0
  %2092 = vperm.xlu0 %2091, %v1905
  %v2093 = vpop.permute.xlu0 %2092
  %2094 = vset.pattern.permute.xlu0 0
  %2095 = vperm.xlu0 %2094, %v1906
  %v2096 = vpop.permute.xlu0 %2095
  %2097 = vset.pattern.permute.xlu0 0
  %2098 = vperm.xlu0 %2097, %v1907
  %v2099 = vpop.permute.xlu0 %2098
  %vm2100 = vcmp.eq.s32.totalorder %v1910, 1
  %vm2101 = vcmp.eq.s32.totalorder %v1913, 1
  %vm2102 = vcmp.eq.s32.totalorder %v1916, 1
  %vm2103 = vcmp.eq.s32.totalorder %v1919, 1
  %vm2104 = vcmp.eq.s32.totalorder %v1922, 1
  %vm2105 = vcmp.eq.s32.totalorder %v1925, 1
  %vm2106 = vcmp.eq.s32.totalorder %v1928, 1
  %vm2107 = vcmp.eq.s32.totalorder %v1931, 1
  %vm2108 = vcmp.eq.s32.totalorder %v1934, 1
  %vm2109 = vcmp.eq.s32.totalorder %v1937, 1
  %vm2110 = vcmp.eq.s32.totalorder %v1940, 1
  %vm2111 = vcmp.eq.s32.totalorder %v1943, 1
  %vm2112 = vcmp.eq.s32.totalorder %v1946, 1
  %vm2113 = vcmp.eq.s32.totalorder %v1949, 1
  %vm2114 = vcmp.eq.s32.totalorder %v1952, 1
  %vm2115 = vcmp.eq.s32.totalorder %v1955, 1
  %vm2116 = vcmp.eq.s32.totalorder %v1958, 1
  %vm2117 = vcmp.eq.s32.totalorder %v1961, 1
  %vm2118 = vcmp.eq.s32.totalorder %v1964, 1
  %vm2119 = vcmp.eq.s32.totalorder %v1967, 1
  %vm2120 = vcmp.eq.s32.totalorder %v1970, 1
  %vm2121 = vcmp.eq.s32.totalorder %v1973, 1
  %vm2122 = vcmp.eq.s32.totalorder %v1976, 1
  %vm2123 = vcmp.eq.s32.totalorder %v1979, 1
  %vm2124 = vcmp.eq.s32.totalorder %v1982, 1
  %vm2125 = vcmp.eq.s32.totalorder %v1985, 1
  %vm2126 = vcmp.eq.s32.totalorder %v1988, 1
  %vm2127 = vcmp.eq.s32.totalorder %v1991, 1
  %vm2128 = vcmp.eq.s32.totalorder %v1994, 1
  %vm2129 = vcmp.eq.s32.totalorder %v1997, 1
  %vm2130 = vcmp.eq.s32.totalorder %v2000, 1
  %vm2131 = vcmp.eq.s32.totalorder %v2003, 1
  %vm2132 = vcmp.eq.s32.totalorder %v2006, 1
  %vm2133 = vcmp.eq.s32.totalorder %v2009, 1
  %vm2134 = vcmp.eq.s32.totalorder %v2012, 1
  %vm2135 = vcmp.eq.s32.totalorder %v2015, 1
  %vm2136 = vcmp.eq.s32.totalorder %v2018, 1
  %vm2137 = vcmp.eq.s32.totalorder %v2021, 1
  %vm2138 = vcmp.eq.s32.totalorder %v2024, 1
  %vm2139 = vcmp.eq.s32.totalorder %v2027, 1
  %vm2140 = vcmp.eq.s32.totalorder %v2030, 1
  %vm2141 = vcmp.eq.s32.totalorder %v2033, 1
  %vm2142 = vcmp.eq.s32.totalorder %v2036, 1
  %vm2143 = vcmp.eq.s32.totalorder %v2039, 1
  %vm2144 = vcmp.eq.s32.totalorder %v2042, 1
  %vm2145 = vcmp.eq.s32.totalorder %v2045, 1
  %vm2146 = vcmp.eq.s32.totalorder %v2048, 1
  %vm2147 = vcmp.eq.s32.totalorder %v2051, 1
  %vm2148 = vcmp.eq.s32.totalorder %v2054, 1
  %vm2149 = vcmp.eq.s32.totalorder %v2057, 1
  %vm2150 = vcmp.eq.s32.totalorder %v2060, 1
  %vm2151 = vcmp.eq.s32.totalorder %v2063, 1
  %vm2152 = vcmp.eq.s32.totalorder %v2066, 1
  %vm2153 = vcmp.eq.s32.totalorder %v2069, 1
  %vm2154 = vcmp.eq.s32.totalorder %v2072, 1
  %vm2155 = vcmp.eq.s32.totalorder %v2075, 1
  %vm2156 = vcmp.eq.s32.totalorder %v2078, 1
  %vm2157 = vcmp.eq.s32.totalorder %v2081, 1
  %vm2158 = vcmp.eq.s32.totalorder %v2084, 1
  %vm2159 = vcmp.eq.s32.totalorder %v2087, 1
  %vm2160 = vcmp.eq.s32.totalorder %v2090, 1
  %vm2161 = vcmp.eq.s32.totalorder %v2093, 1
  %vm2162 = vcmp.eq.s32.totalorder %v2096, 1
  %vm2163 = vcmp.eq.s32.totalorder %v2099, 1
  %v2164 = vsel %vm2100, nan, %v1590
  %v2165 = vsel %vm2101, nan, %v1593
  %v2166 = vsel %vm2102, nan, %v1598
  %v2167 = vsel %vm2103, nan, %v1601
  %v2168 = vsel %vm2104, nan, %v1606
  %v2169 = vsel %vm2105, nan, %v1609
  %v2170 = vsel %vm2106, nan, %v1614
  %v2171 = vsel %vm2107, nan, %v1617
  %v2172 = vsel %vm2108, nan, %v1622
  %v2173 = vsel %vm2109, nan, %v1625
  %v2174 = vsel %vm2110, nan, %v1630
  %v2175 = vsel %vm2111, nan, %v1633
  %v2176 = vsel %vm2112, nan, %v1638
  %v2177 = vsel %vm2113, nan, %v1641
  %v2178 = vsel %vm2114, nan, %v1646
  %v2179 = vsel %vm2115, nan, %v1649
  %v2180 = vsel %vm2116, nan, %v1654
  %v2181 = vsel %vm2117, nan, %v1657
  %v2182 = vsel %vm2118, nan, %v1662
  %v2183 = vsel %vm2119, nan, %v1665
  %v2184 = vsel %vm2120, nan, %v1670
  %v2185 = vsel %vm2121, nan, %v1673
  %v2186 = vsel %vm2122, nan, %v1678
  %v2187 = vsel %vm2123, nan, %v1681
  %v2188 = vsel %vm2124, nan, %v1686
  %v2189 = vsel %vm2125, nan, %v1689
  %v2190 = vsel %vm2126, nan, %v1694
  %v2191 = vsel %vm2127, nan, %v1697
  %v2192 = vsel %vm2128, nan, %v1702
  %v2193 = vsel %vm2129, nan, %v1705
  %v2194 = vsel %vm2130, nan, %v1710
  %v2195 = vsel %vm2131, nan, %v1713
  %v2196 = vsel %vm2132, nan, %v1718
  %v2197 = vsel %vm2133, nan, %v1721
  %v2198 = vsel %vm2134, nan, %v1726
  %v2199 = vsel %vm2135, nan, %v1729
  %v2200 = vsel %vm2136, nan, %v1734
  %v2201 = vsel %vm2137, nan, %v1737
  %v2202 = vsel %vm2138, nan, %v1742
  %v2203 = vsel %vm2139, nan, %v1745
  %v2204 = vsel %vm2140, nan, %v1750
  %v2205 = vsel %vm2141, nan, %v1753
  %v2206 = vsel %vm2142, nan, %v1758
  %v2207 = vsel %vm2143, nan, %v1761
  %v2208 = vsel %vm2144, nan, %v1766
  %v2209 = vsel %vm2145, nan, %v1769
  %v2210 = vsel %vm2146, nan, %v1774
  %v2211 = vsel %vm2147, nan, %v1777
  %v2212 = vsel %vm2148, nan, %v1782
  %v2213 = vsel %vm2149, nan, %v1785
  %v2214 = vsel %vm2150, nan, %v1790
  %v2215 = vsel %vm2151, nan, %v1793
  %v2216 = vsel %vm2152, nan, %v1798
  %v2217 = vsel %vm2153, nan, %v1801
  %v2218 = vsel %vm2154, nan, %v1806
  %v2219 = vsel %vm2155, nan, %v1809
  %v2220 = vsel %vm2156, nan, %v1814
  %v2221 = vsel %vm2157, nan, %v1817
  %v2222 = vsel %vm2158, nan, %v1822
  %v2223 = vsel %vm2159, nan, %v1825
  %v2224 = vsel %vm2160, nan, %v1830
  %v2225 = vsel %vm2161, nan, %v1833
  %v2226 = vsel %vm2162, nan, %v1838
  %v2227 = vsel %vm2163, nan, %v1841
  %vm2228 = vcmask 130048
  %2229 = vst.msk [vmem:[%s7] sm:$0xff] %vm2228, %v2164
  %2230 = vst.msk [vmem:[%s7 + $0x8] sm:$0xff] %vm2228, %v2165
  %2231 = vst.msk [vmem:[%s7 + $0x10] sm:$0xff] %vm2228, %v2166
  %2232 = vst.msk [vmem:[%s7 + $0x18] sm:$0xff] %vm2228, %v2167
  %2233 = vst.msk [vmem:[%s7 + $0x20] sm:$0xff] %vm2228, %v2168
  %2234 = vst.msk [vmem:[%s7 + $0x28] sm:$0xff] %vm2228, %v2169
  %2235 = vst.msk [vmem:[%s7 + $0x30] sm:$0xff] %vm2228, %v2170
  %2236 = vst.msk [vmem:[%s7 + $0x38] sm:$0xff] %vm2228, %v2171
  %2237 = vst.msk [vmem:[%s7 + $0x40] sm:$0xff] %vm2228, %v2172
  %2238 = vst.msk [vmem:[%s7 + $0x48] sm:$0xff] %vm2228, %v2173
  %2239 = vst.msk [vmem:[%s7 + $0x50] sm:$0xff] %vm2228, %v2174
  %2240 = vst.msk [vmem:[%s7 + $0x58] sm:$0xff] %vm2228, %v2175
  %2241 = vst.msk [vmem:[%s7 + $0x60] sm:$0xff] %vm2228, %v2176
  %2242 = vst.msk [vmem:[%s7 + $0x68] sm:$0xff] %vm2228, %v2177
  %2243 = vst.msk [vmem:[%s7 + $0x70] sm:$0xff] %vm2228, %v2178
  %2244 = vst.msk [vmem:[%s7 + $0x78] sm:$0xff] %vm2228, %v2179
  %2245 = vst.msk [vmem:[%s7 + $0x80] sm:$0xff] %vm2228, %v2180
  %2246 = vst.msk [vmem:[%s7 + $0x88] sm:$0xff] %vm2228, %v2181
  %2247 = vst.msk [vmem:[%s7 + $0x90] sm:$0xff] %vm2228, %v2182
  %2248 = vst.msk [vmem:[%s7 + $0x98] sm:$0xff] %vm2228, %v2183
  %2249 = vst.msk [vmem:[%s7 + $0xa0] sm:$0xff] %vm2228, %v2184
  %2250 = vst.msk [vmem:[%s7 + $0xa8] sm:$0xff] %vm2228, %v2185
  %2251 = vst.msk [vmem:[%s7 + $0xb0] sm:$0xff] %vm2228, %v2186
  %2252 = vst.msk [vmem:[%s7 + $0xb8] sm:$0xff] %vm2228, %v2187
  %2253 = vst.msk [vmem:[%s7 + $0xc0] sm:$0xff] %vm2228, %v2188
  %2254 = vst.msk [vmem:[%s7 + $0xc8] sm:$0xff] %vm2228, %v2189
  %2255 = vst.msk [vmem:[%s7 + $0xd0] sm:$0xff] %vm2228, %v2190
  %2256 = vst.msk [vmem:[%s7 + $0xd8] sm:$0xff] %vm2228, %v2191
  %2257 = vst.msk [vmem:[%s7 + $0xe0] sm:$0xff] %vm2228, %v2192
  %2258 = vst.msk [vmem:[%s7 + $0xe8] sm:$0xff] %vm2228, %v2193
  %2259 = vst.msk [vmem:[%s7 + $0xf0] sm:$0xff] %vm2228, %v2194
  %2260 = vst.msk [vmem:[%s7 + $0xf8] sm:$0xff] %vm2228, %v2195
  %2261 = vst.msk [vmem:[%s7 + $0x100] sm:$0xff] %vm2228, %v2196
  %2262 = vst.msk [vmem:[%s7 + $0x108] sm:$0xff] %vm2228, %v2197
  %2263 = vst.msk [vmem:[%s7 + $0x110] sm:$0xff] %vm2228, %v2198
  %2264 = vst.msk [vmem:[%s7 + $0x118] sm:$0xff] %vm2228, %v2199
  %2265 = vst.msk [vmem:[%s7 + $0x120] sm:$0xff] %vm2228, %v2200
  %2266 = vst.msk [vmem:[%s7 + $0x128] sm:$0xff] %vm2228, %v2201
  %2267 = vst.msk [vmem:[%s7 + $0x130] sm:$0xff] %vm2228, %v2202
  %2268 = vst.msk [vmem:[%s7 + $0x138] sm:$0xff] %vm2228, %v2203
  %2269 = vst.msk [vmem:[%s7 + $0x140] sm:$0xff] %vm2228, %v2204
  %2270 = vst.msk [vmem:[%s7 + $0x148] sm:$0xff] %vm2228, %v2205
  %2271 = vst.msk [vmem:[%s7 + $0x150] sm:$0xff] %vm2228, %v2206
  %2272 = vst.msk [vmem:[%s7 + $0x158] sm:$0xff] %vm2228, %v2207
  %2273 = vst.msk [vmem:[%s7 + $0x160] sm:$0xff] %vm2228, %v2208
  %2274 = vst.msk [vmem:[%s7 + $0x168] sm:$0xff] %vm2228, %v2209
  %2275 = vst.msk [vmem:[%s7 + $0x170] sm:$0xff] %vm2228, %v2210
  %2276 = vst.msk [vmem:[%s7 + $0x178] sm:$0xff] %vm2228, %v2211
  %2277 = vst.msk [vmem:[%s7 + $0x180] sm:$0xff] %vm2228, %v2212
  %2278 = vst.msk [vmem:[%s7 + $0x188] sm:$0xff] %vm2228, %v2213
  %2279 = vst.msk [vmem:[%s7 + $0x190] sm:$0xff] %vm2228, %v2214
  %2280 = vst.msk [vmem:[%s7 + $0x198] sm:$0xff] %vm2228, %v2215
  %2281 = vst.msk [vmem:[%s7 + $0x1a0] sm:$0xff] %vm2228, %v2216
  %2282 = vst.msk [vmem:[%s7 + $0x1a8] sm:$0xff] %vm2228, %v2217
  %2283 = vst.msk [vmem:[%s7 + $0x1b0] sm:$0xff] %vm2228, %v2218
  %2284 = vst.msk [vmem:[%s7 + $0x1b8] sm:$0xff] %vm2228, %v2219
  %2285 = vst.msk [vmem:[%s7 + $0x1c0] sm:$0xff] %vm2228, %v2220
  %2286 = vst.msk [vmem:[%s7 + $0x1c8] sm:$0xff] %vm2228, %v2221
  %2287 = vst.msk [vmem:[%s7 + $0x1d0] sm:$0xff] %vm2228, %v2222
  %2288 = vst.msk [vmem:[%s7 + $0x1d8] sm:$0xff] %vm2228, %v2223
  %2289 = vst.msk [vmem:[%s7 + $0x1e0] sm:$0xff] %vm2228, %v2224
  %2290 = vst.msk [vmem:[%s7 + $0x1e8] sm:$0xff] %vm2228, %v2225
  %2291 = vst.msk [vmem:[%s7 + $0x1f0] sm:$0xff] %vm2228, %v2226
  %2292 = vst.msk [vmem:[%s7 + $0x1f8] sm:$0xff] %vm2228, %v2227
  // Predicated region
  $region30: #{fused_forward.1} parent=0 // pred_check
    _
  $region31: #{fused_forward.1} parent=0 // pred_check_branch
    %2294 = sbr.rel (0) target = $region33
  $region32: #{fused_forward.1} parent=0 // pred_region
    _
  $region33: #{fused_forward.1} parent=0 // pred_fallthru
    _
  // Predicated region
  $region34: #{fused_forward.1} parent=0 // pred_check
    _
  $region35: #{fused_forward.1} parent=0 // pred_check_branch
    %2296 = sbr.rel (0) target = $region37
  $region36: #{fused_forward.1} parent=0 // pred_region
    _
  $region37: #{fused_forward.1} parent=0 // pred_fallthru
    _

</llo_original>
